<compile_context>
chip_gen: v6e
topology: v6e:2x2x1
jax: 0.10.0
libtpu: 0.0.40
codegen_flags: <defaults>
</compile_context>

<pallas_src>
import jax
import jax.numpy as jnp
from jax.experimental import pallas as pl
from jax.experimental.pallas import tpu as pltpu


def _round_up(n, m):
    return ((n + m - 1) // m) * m


def _pad2(a, rows, cols):
    r, c = a.shape
    return jnp.pad(a, ((0, rows - r), (0, cols - c)))


def tcn_forward(x, params, *, time_tile=512):
    """x: (B, T, input_size) f32 -> (B, T, output_size) f32. Matches TCN.forward."""
    B, T, Cin = x.shape
    blocks = params["blocks"]
    lin_w, lin_b = params["lin_w"], params["lin_b"]
    out_size = lin_w.shape[0]
    assert all(blk["w1"].shape[2] == 2 for blk in blocks), "kernel assumes kernel_size=2"

    # lane-dense padded widths for all intermediate activations / outputs
    Cpad = _round_up(max([Cin] + [blk["w1"].shape[0] for blk in blocks]), 128)
    Opad = _round_up(out_size, 128)

    # halo = receptive field of the fused stack (two k=2 convs per block)
    H = _round_up(max(sum(2 * int(blk["dilation"]) for blk in blocks), 8), 8)
    TT = max(_round_up(min(T, time_tile), 8), H)      # time tile (multiple of 8, >= H)
    nT = -(-T // TT)
    W = H + TT                                        # in-kernel window rows

    # Raw-input lane width.  If block 0 has a 1x1 downsample the raw input never
    # feeds a residual add at full width, so keep it narrow (huge HBM saving for
    # small input_size).  Otherwise it must match Cpad for the residual add.
    first_has_ds = "wd" in blocks[0]
    C0 = _round_up(Cin, 8) if first_has_ds else Cpad

    # input: pad channels to C0, pad tail to a tile multiple, prepend one zero
    # tile so every output tile has a full "previous tile" to take its halo from.
    x_pad = jnp.pad(x.astype(jnp.float32),
                    ((0, 0), (TT, nT * TT - T), (0, C0 - Cin)))

    # ---- weight preprocessing (tap merge, pad, bf16) --------------------------
    block_meta = []            # (dilation, has_downsample) per block (static)
    w_args, w_specs = [], []

    def add_weight(a):
        w_args.append(a)
        w_specs.append(pl.BlockSpec(a.shape, lambda b, t: (0, 0)))

    def merge_taps(w):   # Conv1d weight (Cout, Cin, 2): tap0 -> x[t-d], tap1 -> x[t]
        cur = _pad2(jnp.transpose(w[:, :, 1]), Cpad, Cpad)
        dly = _pad2(jnp.transpose(w[:, :, 0]), Cpad, Cpad)
        return jnp.concatenate([cur, dly], axis=0).astype(jnp.bfloat16)  # (2*Cpad, Cpad)

    for bi, blk in enumerate(blocks):
        d = int(blk["dilation"])
        has_ds = "wd" in blk
        block_meta.append((d, has_ds))
        if bi == 0:
            # first layer: split taps, contraction width C0 (may be narrow)
            add_weight(_pad2(jnp.transpose(blk["w1"][:, :, 1]), C0, Cpad).astype(jnp.bfloat16))
            add_weight(_pad2(jnp.transpose(blk["w1"][:, :, 0]), C0, Cpad).astype(jnp.bfloat16))
            add_weight(_pad2(blk["b1"][None, :].astype(jnp.float32), 1, Cpad))
            add_weight(merge_taps(blk["w2"]))
            add_weight(_pad2(blk["b2"][None, :].astype(jnp.float32), 1, Cpad))
            if has_ds:
                add_weight(_pad2(jnp.transpose(blk["wd"][:, :, 0]), C0, Cpad).astype(jnp.bfloat16))
                add_weight(_pad2(blk["bd"][None, :].astype(jnp.float32), 1, Cpad))
        else:
            add_weight(merge_taps(blk["w1"]))
            add_weight(_pad2(blk["b1"][None, :].astype(jnp.float32), 1, Cpad))
            add_weight(merge_taps(blk["w2"]))
            add_weight(_pad2(blk["b2"][None, :].astype(jnp.float32), 1, Cpad))
            if has_ds:
                add_weight(_pad2(jnp.transpose(blk["wd"][:, :, 0]), Cpad, Cpad).astype(jnp.bfloat16))
                add_weight(_pad2(blk["bd"][None, :].astype(jnp.float32), 1, Cpad))

    add_weight(_pad2(jnp.transpose(lin_w), Cpad, Opad).astype(jnp.bfloat16))
    add_weight(_pad2(lin_b[None, :].astype(jnp.float32), 1, Opad))

    # ---- fused kernel ---------------------------------------------------------
    def kernel(prev_ref, cur_ref, *refs):
        o_ref = refs[-1]
        wrefs = refs[:-1]

        # (H+TT, C0) f32 activation window; last H rows of the previous tile
        # provide the causal halo, only the last TT rows are ever stored.
        halo = prev_ref[0, pl.ds(TT - H, H), :]
        act = jnp.concatenate([halo, cur_ref[0]], axis=0)

        t_idx = jax.lax.broadcasted_iota(jnp.int32, (W, 1), 0)   # hoisted once

        def causal_shift(v, d):
            # causal delay by d rows: XLU roll + VALU select (rows that would
            # wrap are zeroed; only discarded halo rows are affected)
            return jnp.where(t_idx >= d, pltpu.roll(v, shift=d, axis=0), 0.0)

        i = 0
        for bi, (d, has_ds) in enumerate(block_meta):
            if bi == 0:
                w1c = wrefs[i][...]
                w1d = wrefs[i + 1][...]
                b1 = wrefs[i + 2][...]
                w2 = wrefs[i + 3][...]
                b2 = wrefs[i + 4][...]
                i += 5
                if has_ds:
                    wd = wrefs[i][...]
                    bd = wrefs[i + 1][...]
                    i += 2

                src_b = act.astype(jnp.bfloat16)
                src_shift_b = causal_shift(act, d).astype(jnp.bfloat16)
                # conv1 (dilated causal k=2) + bias + ReLU     (dropout = id)
                h = (jnp.dot(src_b, w1c, preferred_element_type=jnp.float32)
                     + jnp.dot(src_shift_b, w1d, preferred_element_type=jnp.float32)
                     + b1)
                h = jnp.maximum(h, 0.0)
                # conv2 (taps merged) + bias + ReLU
                hk = jnp.concatenate([h, causal_shift(h, d)], axis=-1).astype(jnp.bfloat16)
                h2 = jnp.dot(hk, w2, preferred_element_type=jnp.float32) + b2
                h2 = jnp.maximum(h2, 0.0)
                # residual branch (1x1 conv iff Cin != Cout), final ReLU
                if has_ds:
                    res = jnp.dot(src_b, wd, preferred_element_type=jnp.float32) + bd
                else:
                    res = act           # C0 == Cpad in this configuration
                act = jnp.maximum(h2 + res, 0.0)
            else:
                w1 = wrefs[i][...]
                b1 = wrefs[i + 1][...]
                w2 = wrefs[i + 2][...]
                b2 = wrefs[i + 3][...]
                i += 4
                if has_ds:
                    wd = wrefs[i][...]
                    bd = wrefs[i + 1][...]
                    i += 2

                xk = jnp.concatenate([act, causal_shift(act, d)], axis=-1).astype(jnp.bfloat16)
                h = jnp.dot(xk, w1, preferred_element_type=jnp.float32) + b1
                h = jnp.maximum(h, 0.0)
                hk = jnp.concatenate([h, causal_shift(h, d)], axis=-1).astype(jnp.bfloat16)
                h2 = jnp.dot(hk, w2, preferred_element_type=jnp.float32) + b2
                h2 = jnp.maximum(h2, 0.0)
                if has_ds:
                    res = jnp.dot(act.astype(jnp.bfloat16), wd,
                                  preferred_element_type=jnp.float32) + bd
                else:
                    res = act
                act = jnp.maximum(h2 + res, 0.0)

        # final Linear on the last TT (valid) rows only
        lw = wrefs[i][...]
        lb = wrefs[i + 1][...]
        out = jnp.dot(act[H:, :].astype(jnp.bfloat16), lw,
                      preferred_element_type=jnp.float32) + lb
        o_ref[0] = out

    prev_spec = pl.BlockSpec((1, TT, C0), lambda b, t: (b, t, 0))
    cur_spec = pl.BlockSpec((1, TT, C0), lambda b, t: (b, t + 1, 0))

    y_full = pl.pallas_call(
        kernel,
        out_shape=jax.ShapeDtypeStruct((B, nT * TT, Opad), jnp.float32),
        grid=(B, nT),
        in_specs=[prev_spec, cur_spec] + w_specs,
        out_specs=pl.BlockSpec((1, TT, Opad), lambda b, t: (b, t, 0)),
        compiler_params=pltpu.CompilerParams(
            dimension_semantics=("parallel", "parallel"),
            vmem_limit_bytes=32 * 1024 * 1024),
    )(x_pad, x_pad, *w_args)

    return y_full[:, :T, :out_size]


# ------------------------------ parameters ------------------------------------
def init_tcn_params(key, input_size, output_size, num_channels, kernel_size=2):
    keys = iter(jax.random.split(key, 6 * len(num_channels) + 2))
    blocks = []
    for i, cout in enumerate(num_channels):
        cin = input_size if i == 0 else num_channels[i - 1]
        dilation = 2 ** i
        # weight_norm reparameterization folds into the effective weight; the
        # module's init_weights() draws the conv weights from N(0, 0.01).
        blk = {
            "dilation": dilation,
            "w1": 0.01 * jax.random.normal(next(keys), (cout, cin, kernel_size),
                                           jnp.float32),
            "b1": jax.random.uniform(next(keys), (cout,), jnp.float32,
                                     -(cin * kernel_size) ** -0.5,
                                     (cin * kernel_size) ** -0.5),
            "w2": 0.01 * jax.random.normal(next(keys), (cout, cout, kernel_size),
                                           jnp.float32),
            "b2": jax.random.uniform(next(keys), (cout,), jnp.float32,
                                     -(cout * kernel_size) ** -0.5,
                                     (cout * kernel_size) ** -0.5),
        }
        if cin != cout:
            blk["wd"] = 0.01 * jax.random.normal(next(keys), (cout, cin, 1),
                                                 jnp.float32)
            blk["bd"] = jax.random.uniform(next(keys), (cout,), jnp.float32,
                                           -cin ** -0.5, cin ** -0.5)
        else:
            next(keys); next(keys)  # keep key consumption deterministic
        blocks.append(blk)
    hidden = num_channels[-1]
    lin_w = jax.random.normal(next(keys), (output_size, hidden),
                              jnp.float32) * hidden ** -0.5
    lin_b = jax.random.uniform(next(keys), (output_size,), jnp.float32,
                               -hidden ** -0.5, hidden ** -0.5)
    return {"blocks": blocks, "lin_w": lin_w, "lin_b": lin_b}


# ------------------------------ pure-JAX reference -----------------------------
def tcn_reference(x, params):
    """Pure-JAX f32 reference of the same forward pass (for correctness check)."""
    y = x
    for blk in params["blocks"]:
        d = blk["dilation"]

        def conv(v, w, b):
            cout, cin, K = w.shape
            T = v.shape[1]
            vp = jnp.pad(v, ((0, 0), ((K - 1) * d, 0), (0, 0)))
            acc = jnp.zeros(v.shape[:2] + (cout,), jnp.float32)
            for k in range(K):
                acc = acc + jnp.einsum("btc,oc->bto",
                                       vp[:, k * d:k * d + T, :], w[:, :, k])
            return acc + b[None, None, :]

        h = jax.nn.relu(conv(y, blk["w1"], blk["b1"]))
        h2 = jax.nn.relu(conv(h, blk["w2"], blk["b2"]))
        if "wd" in blk:
            res = (jnp.einsum("btc,oc->bto", y, blk["wd"][:, :, 0])
                   + blk["bd"][None, None, :])
        else:
            res = y
        y = jax.nn.relu(h2 + res)
    return (jnp.einsum("bth,oh->bto", y, params["lin_w"])
            + params["lin_b"][None, None, :])


if __name__ == "__main__":
    key = jax.random.PRNGKey(0)
    k_param, k_param2, k_x, k_x2, k_x3 = jax.random.split(key, 5)

    # bf16 matmul operands vs f32 reference -> loose absolute tolerance
    TOL = 5e-2

    # config A: first block HAS a 1x1 downsample (input_size != num_channels[0])
    params = init_tcn_params(k_param, 4, 3, [8, 8])       # dilations 1, 2

    # test 1: single time tile
    x = jax.random.normal(k_x, (2, 16, 4), jnp.float32)
    y = jax.block_until_ready(tcn_forward(x, params))
    assert y.shape == (2, 16, 3)
    err = float(jnp.max(jnp.abs(y - tcn_reference(x, params))))
    assert err < TOL, f"mismatch vs reference (config A, single tile): {err}"

    # test 2: multiple time tiles with halo carry + ragged tail (T=40, tile=16)
    x2 = jax.random.normal(k_x2, (2, 40, 4), jnp.float32)
    y2 = jax.block_until_ready(tcn_forward(x2, params, time_tile=16))
    assert y2.shape == (2, 40, 3)
    err2 = float(jnp.max(jnp.abs(y2 - tcn_reference(x2, params))))
    assert err2 < TOL, f"mismatch vs reference (config A, tiled): {err2}"

    # config B: first block has NO downsample (input_size == num_channels[0]),
    # second block has one -> exercises both residual paths.
    params_b = init_tcn_params(k_param2, 8, 3, [8, 16])
    x3 = jax.random.normal(k_x3, (2, 24, 8), jnp.float32)
    y3 = jax.block_until_ready(tcn_forward(x3, params_b, time_tile=16))
    assert y3.shape == (2, 24, 3)
    err3 = float(jnp.max(jnp.abs(y3 - tcn_reference(x3, params_b))))
    assert err3 < TOL, f"mismatch vs reference (config B): {err3}"

    # TODO(synk): dropout is implemented as eval-mode identity (no train-mode RNG).
    print("KERNEL_OK")
</pallas_src>

<mosaic_0001>
module attributes {stable_mosaic.version = 11 : i64} {
  func.func @kernel(%arg0: i32, %arg1: i32, %arg2: memref<1x16x8xf32, #tpu.memory_space<vmem>>, %arg3: memref<1x16x8xf32, #tpu.memory_space<vmem>>, %arg4: memref<8x128xbf16, #tpu.memory_space<vmem>>, %arg5: memref<8x128xbf16, #tpu.memory_space<vmem>>, %arg6: memref<1x128xf32, #tpu.memory_space<vmem>>, %arg7: memref<256x128xbf16, #tpu.memory_space<vmem>>, %arg8: memref<1x128xf32, #tpu.memory_space<vmem>>, %arg9: memref<8x128xbf16, #tpu.memory_space<vmem>>, %arg10: memref<1x128xf32, #tpu.memory_space<vmem>>, %arg11: memref<256x128xbf16, #tpu.memory_space<vmem>>, %arg12: memref<1x128xf32, #tpu.memory_space<vmem>>, %arg13: memref<256x128xbf16, #tpu.memory_space<vmem>>, %arg14: memref<1x128xf32, #tpu.memory_space<vmem>>, %arg15: memref<128x128xbf16, #tpu.memory_space<vmem>>, %arg16: memref<1x128xf32, #tpu.memory_space<vmem>>, %arg17: memref<1x16x128xf32, #tpu.memory_space<vmem>>) attributes {dimension_semantics = [#tpu.dimension_semantics<parallel>, #tpu.dimension_semantics<parallel>], iteration_bounds = array<i64: 2, 1>, scalar_prefetch = 0 : i64, scratch_operands = 0 : i64, tpu.core_type = #tpu.core_type<tc>, window_params = [{transform_indices = @transform_0, window_bounds = array<i64: 1, 16, 8>}, {transform_indices = @transform_1, window_bounds = array<i64: 1, 16, 8>}, {pipeline_mode = #tpu.pipeline_mode<synchronous>, transform_indices = @transform_2, window_bounds = array<i64: 8, 128>}, {pipeline_mode = #tpu.pipeline_mode<synchronous>, transform_indices = @transform_3, window_bounds = array<i64: 8, 128>}, {pipeline_mode = #tpu.pipeline_mode<synchronous>, transform_indices = @transform_4, window_bounds = array<i64: 1, 128>}, {pipeline_mode = #tpu.pipeline_mode<synchronous>, transform_indices = @transform_5, window_bounds = array<i64: 256, 128>}, {pipeline_mode = #tpu.pipeline_mode<synchronous>, transform_indices = @transform_6, window_bounds = array<i64: 1, 128>}, {pipeline_mode = #tpu.pipeline_mode<synchronous>, transform_indices = @transform_7, window_bounds = array<i64: 8, 128>}, {pipeline_mode = #tpu.pipeline_mode<synchronous>, transform_indices = @transform_8, window_bounds = array<i64: 1, 128>}, {pipeline_mode = #tpu.pipeline_mode<synchronous>, transform_indices = @transform_9, window_bounds = array<i64: 256, 128>}, {pipeline_mode = #tpu.pipeline_mode<synchronous>, transform_indices = @transform_10, window_bounds = array<i64: 1, 128>}, {pipeline_mode = #tpu.pipeline_mode<synchronous>, transform_indices = @transform_11, window_bounds = array<i64: 256, 128>}, {pipeline_mode = #tpu.pipeline_mode<synchronous>, transform_indices = @transform_12, window_bounds = array<i64: 1, 128>}, {pipeline_mode = #tpu.pipeline_mode<synchronous>, transform_indices = @transform_13, window_bounds = array<i64: 128, 128>}, {pipeline_mode = #tpu.pipeline_mode<synchronous>, transform_indices = @transform_14, window_bounds = array<i64: 1, 128>}, {transform_indices = @transform_15, window_bounds = array<i64: 1, 16, 128>}]} {
    %c0 = arith.constant 0 : index
    %c8 = arith.constant 8 : index
    %c0_0 = arith.constant 0 : index
    %0 = vector.load %arg2[%c0, %c8, %c0_0] : memref<1x16x8xf32, #tpu.memory_space<vmem>>, vector<1x8x8xf32>
    %1 = vector.shape_cast %0 : vector<1x8x8xf32> to vector<8x8xf32>
    %c0_1 = arith.constant 0 : index
    %c0_2 = arith.constant 0 : index
    %c0_3 = arith.constant 0 : index
    %2 = vector.load %arg3[%c0_1, %c0_2, %c0_3] : memref<1x16x8xf32, #tpu.memory_space<vmem>>, vector<1x16x8xf32>
    %3 = vector.shape_cast %2 : vector<1x16x8xf32> to vector<16x8xf32>
    %4 = tpu.concatenate %1, %3 in 0 : vector<8x8xf32>, vector<16x8xf32> -> vector<24x8xf32>
    %5 = tpu.iota {dimensions = array<i32: 0>} : vector<24x1xi32>
    %c0_4 = arith.constant 0 : index
    %c0_5 = arith.constant 0 : index
    %6 = vector.load %arg4[%c0_4, %c0_5] : memref<8x128xbf16, #tpu.memory_space<vmem>>, vector<8x128xbf16>
    %c0_6 = arith.constant 0 : index
    %c0_7 = arith.constant 0 : index
    %7 = vector.load %arg5[%c0_6, %c0_7] : memref<8x128xbf16, #tpu.memory_space<vmem>>, vector<8x128xbf16>
    %c0_8 = arith.constant 0 : index
    %c0_9 = arith.constant 0 : index
    %8 = vector.load %arg6[%c0_8, %c0_9] : memref<1x128xf32, #tpu.memory_space<vmem>>, vector<1x128xf32>
    %c0_10 = arith.constant 0 : index
    %c0_11 = arith.constant 0 : index
    %9 = vector.load %arg7[%c0_10, %c0_11] : memref<256x128xbf16, #tpu.memory_space<vmem>>, vector<256x128xbf16>
    %c0_12 = arith.constant 0 : index
    %c0_13 = arith.constant 0 : index
    %10 = vector.load %arg8[%c0_12, %c0_13] : memref<1x128xf32, #tpu.memory_space<vmem>>, vector<1x128xf32>
    %c0_14 = arith.constant 0 : index
    %c0_15 = arith.constant 0 : index
    %11 = vector.load %arg9[%c0_14, %c0_15] : memref<8x128xbf16, #tpu.memory_space<vmem>>, vector<8x128xbf16>
    %c0_16 = arith.constant 0 : index
    %c0_17 = arith.constant 0 : index
    %12 = vector.load %arg10[%c0_16, %c0_17] : memref<1x128xf32, #tpu.memory_space<vmem>>, vector<1x128xf32>
    %13 = arith.truncf %4 : vector<24x8xf32> to vector<24x8xbf16>
    %c1_i32 = arith.constant 1 : i32
    %14 = vector.broadcast %c1_i32 : i32 to vector<24x1xi32>
    %15 = arith.cmpi sge, %5, %14 : vector<24x1xi32>
    %c1_i32_18 = arith.constant 1 : i32
    %16 = tpu.dynamic_rotate %4 by %c1_i32_18 dim 0 : vector<24x8xf32>, i32 -> vector<24x8xf32>
    %cst = arith.constant 0.000000e+00 : f32
    %17 = vector.shape_cast %15 : vector<24x1xi1> to vector<24x1xi1>
    %18 = vector.broadcast %17 : vector<24x1xi1> to vector<24x8xi1>
    %19 = vector.broadcast %cst : f32 to vector<24x8xf32>
    %20 = arith.select %18, %16, %19 : vector<24x8xi1>, vector<24x8xf32>
    %21 = arith.truncf %20 : vector<24x8xf32> to vector<24x8xbf16>
    %cst_19 = arith.constant dense<0.000000e+00> : vector<24x128xf32>
    %22 = tpu.matmul %13, %6, %cst_19 {dimension_numbers = #tpu.dot_dimension_numbers<[1], [0], [0], [1], [0, 0, 1, 1], [], []>} : vector<24x8xbf16>, vector<8x128xbf16>, vector<24x128xf32> -> vector<24x128xf32>
    %cst_20 = arith.constant dense<0.000000e+00> : vector<24x128xf32>
    %23 = tpu.matmul %21, %7, %cst_20 {dimension_numbers = #tpu.dot_dimension_numbers<[1], [0], [0], [1], [0, 0, 1, 1], [], []>} : vector<24x8xbf16>, vector<8x128xbf16>, vector<24x128xf32> -> vector<24x128xf32>
    %24 = arith.addf %22, %23 : vector<24x128xf32>
    %25 = vector.broadcast %8 : vector<1x128xf32> to vector<24x128xf32>
    %26 = arith.addf %24, %25 : vector<24x128xf32>
    %cst_21 = arith.constant 0.000000e+00 : f32
    %27 = vector.broadcast %cst_21 : f32 to vector<24x128xf32>
    %28 = arith.maximumf %26, %27 : vector<24x128xf32>
    %c1_i32_22 = arith.constant 1 : i32
    %29 = vector.broadcast %c1_i32_22 : i32 to vector<24x1xi32>
    %30 = arith.cmpi sge, %5, %29 : vector<24x1xi32>
    %c1_i32_23 = arith.constant 1 : i32
    %31 = tpu.dynamic_rotate %28 by %c1_i32_23 dim 0 : vector<24x128xf32>, i32 -> vector<24x128xf32>
    %cst_24 = arith.constant 0.000000e+00 : f32
    %32 = vector.shape_cast %30 : vector<24x1xi1> to vector<24x1xi1>
    %33 = vector.broadcast %32 : vector<24x1xi1> to vector<24x128xi1>
    %34 = vector.broadcast %cst_24 : f32 to vector<24x128xf32>
    %35 = arith.select %33, %31, %34 : vector<24x128xi1>, vector<24x128xf32>
    %36 = tpu.concatenate %28, %35 in 1 : vector<24x128xf32>, vector<24x128xf32> -> vector<24x256xf32>
    %37 = arith.truncf %36 : vector<24x256xf32> to vector<24x256xbf16>
    %cst_25 = arith.constant dense<0.000000e+00> : vector<24x128xf32>
    %38 = tpu.matmul %37, %9, %cst_25 {dimension_numbers = #tpu.dot_dimension_numbers<[1], [0], [0], [1], [0, 0, 1, 1], [], []>} : vector<24x256xbf16>, vector<256x128xbf16>, vector<24x128xf32> -> vector<24x128xf32>
    %39 = vector.broadcast %10 : vector<1x128xf32> to vector<24x128xf32>
    %40 = arith.addf %38, %39 : vector<24x128xf32>
    %cst_26 = arith.constant 0.000000e+00 : f32
    %41 = vector.broadcast %cst_26 : f32 to vector<24x128xf32>
    %42 = arith.maximumf %40, %41 : vector<24x128xf32>
    %cst_27 = arith.constant dense<0.000000e+00> : vector<24x128xf32>
    %43 = tpu.matmul %13, %11, %cst_27 {dimension_numbers = #tpu.dot_dimension_numbers<[1], [0], [0], [1], [0, 0, 1, 1], [], []>} : vector<24x8xbf16>, vector<8x128xbf16>, vector<24x128xf32> -> vector<24x128xf32>
    %44 = vector.broadcast %12 : vector<1x128xf32> to vector<24x128xf32>
    %45 = arith.addf %43, %44 : vector<24x128xf32>
    %46 = arith.addf %42, %45 : vector<24x128xf32>
    %cst_28 = arith.constant 0.000000e+00 : f32
    %47 = vector.broadcast %cst_28 : f32 to vector<24x128xf32>
    %48 = arith.maximumf %46, %47 : vector<24x128xf32>
    %c0_29 = arith.constant 0 : index
    %c0_30 = arith.constant 0 : index
    %49 = vector.load %arg11[%c0_29, %c0_30] : memref<256x128xbf16, #tpu.memory_space<vmem>>, vector<256x128xbf16>
    %c0_31 = arith.constant 0 : index
    %c0_32 = arith.constant 0 : index
    %50 = vector.load %arg12[%c0_31, %c0_32] : memref<1x128xf32, #tpu.memory_space<vmem>>, vector<1x128xf32>
    %c0_33 = arith.constant 0 : index
    %c0_34 = arith.constant 0 : index
    %51 = vector.load %arg13[%c0_33, %c0_34] : memref<256x128xbf16, #tpu.memory_space<vmem>>, vector<256x128xbf16>
    %c0_35 = arith.constant 0 : index
    %c0_36 = arith.constant 0 : index
    %52 = vector.load %arg14[%c0_35, %c0_36] : memref<1x128xf32, #tpu.memory_space<vmem>>, vector<1x128xf32>
    %c2_i32 = arith.constant 2 : i32
    %53 = vector.broadcast %c2_i32 : i32 to vector<24x1xi32>
    %54 = arith.cmpi sge, %5, %53 : vector<24x1xi32>
    %c2_i32_37 = arith.constant 2 : i32
    %55 = tpu.dynamic_rotate %48 by %c2_i32_37 dim 0 : vector<24x128xf32>, i32 -> vector<24x128xf32>
    %cst_38 = arith.constant 0.000000e+00 : f32
    %56 = vector.shape_cast %54 : vector<24x1xi1> to vector<24x1xi1>
    %57 = vector.broadcast %56 : vector<24x1xi1> to vector<24x128xi1>
    %58 = vector.broadcast %cst_38 : f32 to vector<24x128xf32>
    %59 = arith.select %57, %55, %58 : vector<24x128xi1>, vector<24x128xf32>
    %60 = tpu.concatenate %48, %59 in 1 : vector<24x128xf32>, vector<24x128xf32> -> vector<24x256xf32>
    %61 = arith.truncf %60 : vector<24x256xf32> to vector<24x256xbf16>
    %cst_39 = arith.constant dense<0.000000e+00> : vector<24x128xf32>
    %62 = tpu.matmul %61, %49, %cst_39 {dimension_numbers = #tpu.dot_dimension_numbers<[1], [0], [0], [1], [0, 0, 1, 1], [], []>} : vector<24x256xbf16>, vector<256x128xbf16>, vector<24x128xf32> -> vector<24x128xf32>
    %63 = vector.broadcast %50 : vector<1x128xf32> to vector<24x128xf32>
    %64 = arith.addf %62, %63 : vector<24x128xf32>
    %cst_40 = arith.constant 0.000000e+00 : f32
    %65 = vector.broadcast %cst_40 : f32 to vector<24x128xf32>
    %66 = arith.maximumf %64, %65 : vector<24x128xf32>
    %c2_i32_41 = arith.constant 2 : i32
    %67 = vector.broadcast %c2_i32_41 : i32 to vector<24x1xi32>
    %68 = arith.cmpi sge, %5, %67 : vector<24x1xi32>
    %c2_i32_42 = arith.constant 2 : i32
    %69 = tpu.dynamic_rotate %66 by %c2_i32_42 dim 0 : vector<24x128xf32>, i32 -> vector<24x128xf32>
    %cst_43 = arith.constant 0.000000e+00 : f32
    %70 = vector.shape_cast %68 : vector<24x1xi1> to vector<24x1xi1>
    %71 = vector.broadcast %70 : vector<24x1xi1> to vector<24x128xi1>
    %72 = vector.broadcast %cst_43 : f32 to vector<24x128xf32>
    %73 = arith.select %71, %69, %72 : vector<24x128xi1>, vector<24x128xf32>
    %74 = tpu.concatenate %66, %73 in 1 : vector<24x128xf32>, vector<24x128xf32> -> vector<24x256xf32>
    %75 = arith.truncf %74 : vector<24x256xf32> to vector<24x256xbf16>
    %cst_44 = arith.constant dense<0.000000e+00> : vector<24x128xf32>
    %76 = tpu.matmul %75, %51, %cst_44 {dimension_numbers = #tpu.dot_dimension_numbers<[1], [0], [0], [1], [0, 0, 1, 1], [], []>} : vector<24x256xbf16>, vector<256x128xbf16>, vector<24x128xf32> -> vector<24x128xf32>
    %77 = vector.broadcast %52 : vector<1x128xf32> to vector<24x128xf32>
    %78 = arith.addf %76, %77 : vector<24x128xf32>
    %cst_45 = arith.constant 0.000000e+00 : f32
    %79 = vector.broadcast %cst_45 : f32 to vector<24x128xf32>
    %80 = arith.maximumf %78, %79 : vector<24x128xf32>
    %81 = arith.addf %80, %48 : vector<24x128xf32>
    %cst_46 = arith.constant 0.000000e+00 : f32
    %82 = vector.broadcast %cst_46 : f32 to vector<24x128xf32>
    %83 = arith.maximumf %81, %82 : vector<24x128xf32>
    %c0_47 = arith.constant 0 : index
    %c0_48 = arith.constant 0 : index
    %84 = vector.load %arg15[%c0_47, %c0_48] : memref<128x128xbf16, #tpu.memory_space<vmem>>, vector<128x128xbf16>
    %c0_49 = arith.constant 0 : index
    %c0_50 = arith.constant 0 : index
    %85 = vector.load %arg16[%c0_49, %c0_50] : memref<1x128xf32, #tpu.memory_space<vmem>>, vector<1x128xf32>
    %86 = vector.extract_strided_slice %83 {offsets = [8, 0], sizes = [16, 128], strides = [1, 1]} : vector<24x128xf32> to vector<16x128xf32>
    %87 = arith.truncf %86 : vector<16x128xf32> to vector<16x128xbf16>
    %cst_51 = arith.constant dense<0.000000e+00> : vector<16x128xf32>
    %88 = tpu.matmul %87, %84, %cst_51 {dimension_numbers = #tpu.dot_dimension_numbers<[1], [0], [0], [1], [0, 0, 1, 1], [], []>} : vector<16x128xbf16>, vector<128x128xbf16>, vector<16x128xf32> -> vector<16x128xf32>
    %89 = vector.broadcast %85 : vector<1x128xf32> to vector<16x128xf32>
    %90 = arith.addf %88, %89 : vector<16x128xf32>
    %c0_52 = arith.constant 0 : index
    %c0_53 = arith.constant 0 : index
    %c0_54 = arith.constant 0 : index
    %91 = vector.load %arg17[%c0_52, %c0_53, %c0_54] : memref<1x16x128xf32, #tpu.memory_space<vmem>>, vector<1x16x128xf32>
    %92 = vector.shape_cast %91 : vector<1x16x128xf32> to vector<16x128xf32>
    %93 = vector.shape_cast %90 : vector<16x128xf32> to vector<1x16x128xf32>
    tpu.vector_store %arg17[%c0_52, %c0_53, %c0_54], %93 {strides = array<i32>} : memref<1x16x128xf32, #tpu.memory_space<vmem>>, vector<1x16x128xf32>,
    return
  }
  func.func @transform_0(%arg0: i32, %arg1: i32) -> (i32, i32, i32) {
    %c0_i32 = arith.constant 0 : i32
    %c0_i32_0 = arith.constant 0 : i32
    return %arg0, %arg1, %c0_i32 : i32, i32, i32
  }
  func.func @transform_1(%arg0: i32, %arg1: i32) -> (i32, i32, i32) {
    %c1_i32 = arith.constant 1 : i32
    %0 = arith.addi %arg1, %c1_i32 : i32
    %c0_i32 = arith.constant 0 : i32
    %c0_i32_0 = arith.constant 0 : i32
    return %arg0, %0, %c0_i32 : i32, i32, i32
  }
  func.func @transform_2(%arg0: i32, %arg1: i32) -> (i32, i32) {
    %c0_i32 = arith.constant 0 : i32
    %c0_i32_0 = arith.constant 0 : i32
    %c0_i32_1 = arith.constant 0 : i32
    return %c0_i32, %c0_i32_0 : i32, i32
  }
  func.func @transform_3(%arg0: i32, %arg1: i32) -> (i32, i32) {
    %c0_i32 = arith.constant 0 : i32
    %c0_i32_0 = arith.constant 0 : i32
    %c0_i32_1 = arith.constant 0 : i32
    return %c0_i32, %c0_i32_0 : i32, i32
  }
  func.func @transform_4(%arg0: i32, %arg1: i32) -> (i32, i32) {
    %c0_i32 = arith.constant 0 : i32
    %c0_i32_0 = arith.constant 0 : i32
    %c0_i32_1 = arith.constant 0 : i32
    return %c0_i32, %c0_i32_0 : i32, i32
  }
  func.func @transform_5(%arg0: i32, %arg1: i32) -> (i32, i32) {
    %c0_i32 = arith.constant 0 : i32
    %c0_i32_0 = arith.constant 0 : i32
    %c0_i32_1 = arith.constant 0 : i32
    return %c0_i32, %c0_i32_0 : i32, i32
  }
  func.func @transform_6(%arg0: i32, %arg1: i32) -> (i32, i32) {
    %c0_i32 = arith.constant 0 : i32
    %c0_i32_0 = arith.constant 0 : i32
    %c0_i32_1 = arith.constant 0 : i32
    return %c0_i32, %c0_i32_0 : i32, i32
  }
  func.func @transform_7(%arg0: i32, %arg1: i32) -> (i32, i32) {
    %c0_i32 = arith.constant 0 : i32
    %c0_i32_0 = arith.constant 0 : i32
    %c0_i32_1 = arith.constant 0 : i32
    return %c0_i32, %c0_i32_0 : i32, i32
  }
  func.func @transform_8(%arg0: i32, %arg1: i32) -> (i32, i32) {
    %c0_i32 = arith.constant 0 : i32
    %c0_i32_0 = arith.constant 0 : i32
    %c0_i32_1 = arith.constant 0 : i32
    return %c0_i32, %c0_i32_0 : i32, i32
  }
  func.func @transform_9(%arg0: i32, %arg1: i32) -> (i32, i32) {
    %c0_i32 = arith.constant 0 : i32
    %c0_i32_0 = arith.constant 0 : i32
    %c0_i32_1 = arith.constant 0 : i32
    return %c0_i32, %c0_i32_0 : i32, i32
  }
  func.func @transform_10(%arg0: i32, %arg1: i32) -> (i32, i32) {
    %c0_i32 = arith.constant 0 : i32
    %c0_i32_0 = arith.constant 0 : i32
    %c0_i32_1 = arith.constant 0 : i32
    return %c0_i32, %c0_i32_0 : i32, i32
  }
  func.func @transform_11(%arg0: i32, %arg1: i32) -> (i32, i32) {
    %c0_i32 = arith.constant 0 : i32
    %c0_i32_0 = arith.constant 0 : i32
    %c0_i32_1 = arith.constant 0 : i32
    return %c0_i32, %c0_i32_0 : i32, i32
  }
  func.func @transform_12(%arg0: i32, %arg1: i32) -> (i32, i32) {
    %c0_i32 = arith.constant 0 : i32
    %c0_i32_0 = arith.constant 0 : i32
    %c0_i32_1 = arith.constant 0 : i32
    return %c0_i32, %c0_i32_0 : i32, i32
  }
  func.func @transform_13(%arg0: i32, %arg1: i32) -> (i32, i32) {
    %c0_i32 = arith.constant 0 : i32
    %c0_i32_0 = arith.constant 0 : i32
    %c0_i32_1 = arith.constant 0 : i32
    return %c0_i32, %c0_i32_0 : i32, i32
  }
  func.func @transform_14(%arg0: i32, %arg1: i32) -> (i32, i32) {
    %c0_i32 = arith.constant 0 : i32
    %c0_i32_0 = arith.constant 0 : i32
    %c0_i32_1 = arith.constant 0 : i32
    return %c0_i32, %c0_i32_0 : i32, i32
  }
  func.func @transform_15(%arg0: i32, %arg1: i32) -> (i32, i32, i32) {
    %c0_i32 = arith.constant 0 : i32
    %c0_i32_0 = arith.constant 0 : i32
    return %arg0, %arg1, %c0_i32 : i32, i32, i32
  }
}

</mosaic_0001>

<llo_original>
// kernel: tpu_custom_call.1
$region0: #{tpu_custom_call.1}
  #allocation0 [shape = 'u32[]', space=smem, size = 0x4, offset = 0x4, fixed_abs, tag = 'smem constant byte address 0x4 - core index']
  #allocation1 [shape = 'u32[144,128]{1,0:T(1,128)}', space=vmem, size = 0x12000, scoped, tag = 'internal scratch']
  %s0 = inlined_call_operand.vmem [shape: f32[2,32,8], index: 0, kind: input, shape index: {}]
  %s1 = inlined_call_operand.vmem [shape: f32[2,32,8], index: 1, kind: input, shape index: {}]
  %s2 = inlined_call_operand.vmem [shape: bf16[8,128], index: 2, kind: input, shape index: {}]
  %s3 = inlined_call_operand.vmem [shape: bf16[8,128], index: 3, kind: input, shape index: {}]
  %s4 = inlined_call_operand.vmem [shape: f32[1,128], index: 4, kind: input, shape index: {}]
  %s5 = inlined_call_operand.vmem [shape: bf16[256,128], index: 5, kind: input, shape index: {}]
  %s6 = inlined_call_operand.vmem [shape: f32[1,128], index: 6, kind: input, shape index: {}]
  %s7 = inlined_call_operand.vmem [shape: bf16[8,128], index: 7, kind: input, shape index: {}]
  %s8 = inlined_call_operand.vmem [shape: f32[1,128], index: 8, kind: input, shape index: {}]
  %s9 = inlined_call_operand.hbm [shape: bf16[256,128], index: 9, kind: input, shape index: {}]
  %s10 = inlined_call_operand.vmem [shape: f32[1,128], index: 10, kind: input, shape index: {}]
  %s11 = inlined_call_operand.hbm [shape: bf16[256,128], index: 11, kind: input, shape index: {}]
  %s12 = inlined_call_operand.vmem [shape: f32[1,128], index: 12, kind: input, shape index: {}]
  %s13 = inlined_call_operand.hbm [shape: bf16[128,128], index: 13, kind: input, shape index: {}]
  %s14 = inlined_call_operand.vmem [shape: f32[1,128], index: 14, kind: input, shape index: {}]
  %s15 = inlined_call_operand.hbm [shape: f32[2,16,128], index: 15, kind: output, shape index: {}]
  %s16 = sld [smem:[#allocation0]]
  $region105: #{tpu_custom_call.1} parent=0
    _
  %s18 = ssub.s32 1, %s16
  %s19 = scalar_select 0, %s18, %s16
  $region1: #{tpu_custom_call.1} parent=0
    #allocation2 [shape = 'u8[65536]{0}', space=vmem, size = 0x10000, scoped, tag = 'input window, operand 9, single buffered']
    #allocation3 [shape = 's32[2]{0}', space=sflag, size = 0x8, scoped, tag = 'scoped memory for tpu_custom_call.1']
    #allocation4 [shape = 's32[2]{0}', space=sflag, size = 0x8, scoped, tag = 'scoped memory for tpu_custom_call.1']
    #allocation5 [shape = 'u8[65536]{0}', space=vmem, size = 0x10000, scoped, tag = 'input window, operand 11, single buffered']
    #allocation6 [shape = 's32[1]{0}', space=sflag, size = 0x4, scoped, tag = 'scoped memory for tpu_custom_call.1']
    #allocation7 [shape = 'u8[32768]{0}', space=vmem, size = 0x8000, scoped, tag = 'input window, operand 13, single buffered']
    #allocation8 [shape = 'u8[16384]{0}', space=vmem, size = 0x4000, scoped, tag = 'output window, operand 0']
    %20 = vsyncpa [#allocation3], 0
    %21 = vsyncpa [#allocation6], 0
    %22 = vsyncpa [#allocation4], 0
    %s23 = scalar_lea.sflag [#allocation4], 1
    %24 = vsyncpa %s23, 0
    loop: start=0, step=1, limit=4
    $region2: #{tpu_custom_call.1} parent=1 // loop_pre_header
      _
    $region3: #{tpu_custom_call.1} parent=1 // loop_header
      %s26 = sphi 0, %s30
      %p27 = scmp.ge.s32.totalorder %s26, 4
      %s33 = sphi 0, %s45
      %s34 = sphi 0, %s41
      %s35 = sphi 0, %s33
      %s36 = sphi 0, %s34
      %s37 = sphi 0, %s35
      %s38 = sphi 0, %s36
      %s50 = sphi 0, %s52
      %s53 = sphi 0, %s50
      %s54 = sphi 0, %s53
      %s70 = sphi 0, %s54
      %s80 = sphi 0, %s82
      %s83 = sphi 0, %s80
      %s84 = sphi 0, %s83
      %s100 = sphi 0, %s84
      %s104 = sphi 0, %s104
      %s106 = sphi 0, %s104
      %s107 = sphi 0, %s106
      %s121 = sphi 0, %s107
      %s125 = sphi 0, %s125
      %s127 = sphi 0, %s125
      %s128 = sphi 0, %s127
      %s142 = sphi 0, %s128
      %s146 = sphi 0, %s146
      %s148 = sphi 0, %s146
      %s149 = sphi 0, %s148
      %s163 = sphi 0, %s149
      %s167 = sphi 0, %s167
      %s169 = sphi 0, %s167
      %s170 = sphi 0, %s169
      %s184 = sphi 0, %s170
      %s188 = sphi 0, %s188
      %s190 = sphi 0, %s188
      %s191 = sphi 0, %s190
      %s205 = sphi 0, %s191
      %s209 = sphi 0, %s209
      %s211 = sphi 0, %s209
      %s212 = sphi 0, %s211
      %s226 = sphi 0, %s212
      %s230 = sphi 0, %s230
      %s232 = sphi 0, %s230
      %s233 = sphi 0, %s232
      %s247 = sphi 0, %s233
      %s251 = sphi 0, %s251
      %s253 = sphi 0, %s251
      %s254 = sphi 0, %s253
      %s268 = sphi 0, %s254
      %s272 = sphi 0, %s272
      %s274 = sphi 0, %s272
      %s275 = sphi 0, %s274
      %s289 = sphi 0, %s275
      %s293 = sphi 0, %s293
      %s295 = sphi 0, %s293
      %s296 = sphi 0, %s295
      %s310 = sphi 0, %s296
      %s314 = sphi 0, %s314
      %s316 = sphi 0, %s314
      %s317 = sphi 0, %s316
      %s331 = sphi 0, %s317
      %s335 = sphi 0, %s335
      %s337 = sphi 0, %s335
      %s338 = sphi 0, %s337
      %s352 = sphi 0, %s338
      %s356 = sphi 0, %s356
      %s358 = sphi 0, %s356
      %s359 = sphi 0, %s358
      %s373 = sphi 0, %s359
      %s381 = sphi 0, %s383
      %s384 = sphi 0, %s381
      %s385 = sphi 0, %s384
      %s401 = sphi 0, %s385
    $region4: #{tpu_custom_call.1} parent=1 // loop_header_branch
      %29 = sbr.rel (%p27) target = $region8
    $region5: #{tpu_custom_call.1} parent=1 // loop_body
      %s31 = ssub.s32 %s26, 1
      %s32 = ssub.s32 %s26, 2
      %s39 = sadd.s32 1, %s34
      %p40 = scmp.ge.s32.totalorder %s39, 1
      %s41 = scalar_select %p40, 0, %s39
      %s42 = sadd.s32 1, %s33
      %s43 = scalar_select %p40, %s42, %s33
      %p44 = scmp.ge.s32.totalorder %s43, 2
      %s45 = scalar_select %p44, 0, %s43
      %s46 = ssub.s32 %s33, %s45
      %s47 = ssub.s32 %s34, %s41
      %s48 = sor.u32 %s46, %s47
      %p49 = scmp.eq.s32.totalorder %s48, 0
      %s51 = sadd.s32 %s50, 1
      %s52 = scalar_select %p49, %s50, %s51
      %p55 = pneg %p49
      %p56 = scmp.eq.s32.totalorder %s26, 1
      %p57 = por %p55, %p56
      %p58 = scmp.ne.s32.totalorder %s50, %s53
      %p59 = scmp.eq.s32.totalorder %s26, 0
      %p60 = por %p58, %p59
      %p61 = scmp.ne.s32.totalorder %s50, %s53
      %p62 = scmp.eq.s32.totalorder %s31, 1
      %p63 = por %p61, %p62
      %p64 = scmp.ne.s32.totalorder %s53, %s54
      %p65 = scmp.eq.s32.totalorder %s31, 0
      %p66 = por %p64, %p65
      %p67 = scmp.ne.s32.totalorder %s53, %s54
      %p68 = scmp.eq.s32.totalorder %s32, 1
      %p69 = por %p67, %p68
      %p71 = scmp.ne.s32.totalorder %s54, %s70
      %p72 = scmp.eq.s32.totalorder %s32, 0
      %p73 = por %p71, %p72
      %s74 = sadd.s32 %s34, 1
      %s75 = sadd.s32 %s41, 1
      %s76 = ssub.s32 %s33, %s45
      %s77 = ssub.s32 %s74, %s75
      %s78 = sor.u32 %s76, %s77
      %p79 = scmp.eq.s32.totalorder %s78, 0
      %s81 = sadd.s32 %s80, 1
      %s82 = scalar_select %p79, %s80, %s81
      %p85 = pneg %p79
      %p86 = scmp.eq.s32.totalorder %s26, 1
      %p87 = por %p85, %p86
      %p88 = scmp.ne.s32.totalorder %s80, %s83
      %p89 = scmp.eq.s32.totalorder %s26, 0
      %p90 = por %p88, %p89
      %p91 = scmp.ne.s32.totalorder %s80, %s83
      %p92 = scmp.eq.s32.totalorder %s31, 1
      %p93 = por %p91, %p92
      %p94 = scmp.ne.s32.totalorder %s83, %s84
      %p95 = scmp.eq.s32.totalorder %s31, 0
      %p96 = por %p94, %p95
      %p97 = scmp.ne.s32.totalorder %s83, %s84
      %p98 = scmp.eq.s32.totalorder %s32, 1
      %p99 = por %p97, %p98
      %p101 = scmp.ne.s32.totalorder %s84, %s100
      %p102 = scmp.eq.s32.totalorder %s32, 0
      %p103 = por %p101, %p102
      %s105 = sadd.s32 %s104, 1
      %p108 = scmp.eq.s32.totalorder %s26, 1
      %p109 = scmp.ne.s32.totalorder %s104, %s106
      %p110 = scmp.eq.s32.totalorder %s26, 0
      %p111 = por %p109, %p110
      %p112 = scmp.ne.s32.totalorder %s104, %s106
      %p113 = scmp.eq.s32.totalorder %s31, 1
      %p114 = por %p112, %p113
      %p115 = scmp.ne.s32.totalorder %s106, %s107
      %p116 = scmp.eq.s32.totalorder %s31, 0
      %p117 = por %p115, %p116
      %p118 = scmp.ne.s32.totalorder %s106, %s107
      %p119 = scmp.eq.s32.totalorder %s32, 1
      %p120 = por %p118, %p119
      %p122 = scmp.ne.s32.totalorder %s107, %s121
      %p123 = scmp.eq.s32.totalorder %s32, 0
      %p124 = por %p122, %p123
      %s126 = sadd.s32 %s125, 1
      %p129 = scmp.eq.s32.totalorder %s26, 1
      %p130 = scmp.ne.s32.totalorder %s125, %s127
      %p131 = scmp.eq.s32.totalorder %s26, 0
      %p132 = por %p130, %p131
      %p133 = scmp.ne.s32.totalorder %s125, %s127
      %p134 = scmp.eq.s32.totalorder %s31, 1
      %p135 = por %p133, %p134
      %p136 = scmp.ne.s32.totalorder %s127, %s128
      %p137 = scmp.eq.s32.totalorder %s31, 0
      %p138 = por %p136, %p137
      %p139 = scmp.ne.s32.totalorder %s127, %s128
      %p140 = scmp.eq.s32.totalorder %s32, 1
      %p141 = por %p139, %p140
      %p143 = scmp.ne.s32.totalorder %s128, %s142
      %p144 = scmp.eq.s32.totalorder %s32, 0
      %p145 = por %p143, %p144
      %s147 = sadd.s32 %s146, 1
      %p150 = scmp.eq.s32.totalorder %s26, 1
      %p151 = scmp.ne.s32.totalorder %s146, %s148
      %p152 = scmp.eq.s32.totalorder %s26, 0
      %p153 = por %p151, %p152
      %p154 = scmp.ne.s32.totalorder %s146, %s148
      %p155 = scmp.eq.s32.totalorder %s31, 1
      %p156 = por %p154, %p155
      %p157 = scmp.ne.s32.totalorder %s148, %s149
      %p158 = scmp.eq.s32.totalorder %s31, 0
      %p159 = por %p157, %p158
      %p160 = scmp.ne.s32.totalorder %s148, %s149
      %p161 = scmp.eq.s32.totalorder %s32, 1
      %p162 = por %p160, %p161
      %p164 = scmp.ne.s32.totalorder %s149, %s163
      %p165 = scmp.eq.s32.totalorder %s32, 0
      %p166 = por %p164, %p165
      %s168 = sadd.s32 %s167, 1
      %p171 = scmp.eq.s32.totalorder %s26, 1
      %p172 = scmp.ne.s32.totalorder %s167, %s169
      %p173 = scmp.eq.s32.totalorder %s26, 0
      %p174 = por %p172, %p173
      %p175 = scmp.ne.s32.totalorder %s167, %s169
      %p176 = scmp.eq.s32.totalorder %s31, 1
      %p177 = por %p175, %p176
      %p178 = scmp.ne.s32.totalorder %s169, %s170
      %p179 = scmp.eq.s32.totalorder %s31, 0
      %p180 = por %p178, %p179
      %p181 = scmp.ne.s32.totalorder %s169, %s170
      %p182 = scmp.eq.s32.totalorder %s32, 1
      %p183 = por %p181, %p182
      %p185 = scmp.ne.s32.totalorder %s170, %s184
      %p186 = scmp.eq.s32.totalorder %s32, 0
      %p187 = por %p185, %p186
      %s189 = sadd.s32 %s188, 1
      %p192 = scmp.eq.s32.totalorder %s26, 1
      %p193 = scmp.ne.s32.totalorder %s188, %s190
      %p194 = scmp.eq.s32.totalorder %s26, 0
      %p195 = por %p193, %p194
      %p196 = scmp.ne.s32.totalorder %s188, %s190
      %p197 = scmp.eq.s32.totalorder %s31, 1
      %p198 = por %p196, %p197
      %p199 = scmp.ne.s32.totalorder %s190, %s191
      %p200 = scmp.eq.s32.totalorder %s31, 0
      %p201 = por %p199, %p200
      %p202 = scmp.ne.s32.totalorder %s190, %s191
      %p203 = scmp.eq.s32.totalorder %s32, 1
      %p204 = por %p202, %p203
      %p206 = scmp.ne.s32.totalorder %s191, %s205
      %p207 = scmp.eq.s32.totalorder %s32, 0
      %p208 = por %p206, %p207
      %s210 = sadd.s32 %s209, 1
      %p213 = scmp.eq.s32.totalorder %s26, 1
      %p214 = scmp.ne.s32.totalorder %s209, %s211
      %p215 = scmp.eq.s32.totalorder %s26, 0
      %p216 = por %p214, %p215
      %p217 = scmp.ne.s32.totalorder %s209, %s211
      %p218 = scmp.eq.s32.totalorder %s31, 1
      %p219 = por %p217, %p218
      %p220 = scmp.ne.s32.totalorder %s211, %s212
      %p221 = scmp.eq.s32.totalorder %s31, 0
      %p222 = por %p220, %p221
      %p223 = scmp.ne.s32.totalorder %s211, %s212
      %p224 = scmp.eq.s32.totalorder %s32, 1
      %p225 = por %p223, %p224
      %p227 = scmp.ne.s32.totalorder %s212, %s226
      %p228 = scmp.eq.s32.totalorder %s32, 0
      %p229 = por %p227, %p228
      %s231 = sadd.s32 %s230, 1
      %p234 = scmp.eq.s32.totalorder %s26, 1
      %p235 = scmp.ne.s32.totalorder %s230, %s232
      %p236 = scmp.eq.s32.totalorder %s26, 0
      %p237 = por %p235, %p236
      %p238 = scmp.ne.s32.totalorder %s230, %s232
      %p239 = scmp.eq.s32.totalorder %s31, 1
      %p240 = por %p238, %p239
      %p241 = scmp.ne.s32.totalorder %s232, %s233
      %p242 = scmp.eq.s32.totalorder %s31, 0
      %p243 = por %p241, %p242
      %p244 = scmp.ne.s32.totalorder %s232, %s233
      %p245 = scmp.eq.s32.totalorder %s32, 1
      %p246 = por %p244, %p245
      %p248 = scmp.ne.s32.totalorder %s233, %s247
      %p249 = scmp.eq.s32.totalorder %s32, 0
      %p250 = por %p248, %p249
      %s252 = sadd.s32 %s251, 1
      %p255 = scmp.eq.s32.totalorder %s26, 1
      %p256 = scmp.ne.s32.totalorder %s251, %s253
      %p257 = scmp.eq.s32.totalorder %s26, 0
      %p258 = por %p256, %p257
      %p259 = scmp.ne.s32.totalorder %s251, %s253
      %p260 = scmp.eq.s32.totalorder %s31, 1
      %p261 = por %p259, %p260
      %p262 = scmp.ne.s32.totalorder %s253, %s254
      %p263 = scmp.eq.s32.totalorder %s31, 0
      %p264 = por %p262, %p263
      %p265 = scmp.ne.s32.totalorder %s253, %s254
      %p266 = scmp.eq.s32.totalorder %s32, 1
      %p267 = por %p265, %p266
      %p269 = scmp.ne.s32.totalorder %s254, %s268
      %p270 = scmp.eq.s32.totalorder %s32, 0
      %p271 = por %p269, %p270
      %s273 = sadd.s32 %s272, 1
      %p276 = scmp.eq.s32.totalorder %s26, 1
      %p277 = scmp.ne.s32.totalorder %s272, %s274
      %p278 = scmp.eq.s32.totalorder %s26, 0
      %p279 = por %p277, %p278
      %p280 = scmp.ne.s32.totalorder %s272, %s274
      %p281 = scmp.eq.s32.totalorder %s31, 1
      %p282 = por %p280, %p281
      %p283 = scmp.ne.s32.totalorder %s274, %s275
      %p284 = scmp.eq.s32.totalorder %s31, 0
      %p285 = por %p283, %p284
      %p286 = scmp.ne.s32.totalorder %s274, %s275
      %p287 = scmp.eq.s32.totalorder %s32, 1
      %p288 = por %p286, %p287
      %p290 = scmp.ne.s32.totalorder %s275, %s289
      %p291 = scmp.eq.s32.totalorder %s32, 0
      %p292 = por %p290, %p291
      %s294 = sadd.s32 %s293, 1
      %p297 = scmp.eq.s32.totalorder %s26, 1
      %p298 = scmp.ne.s32.totalorder %s293, %s295
      %p299 = scmp.eq.s32.totalorder %s26, 0
      %p300 = por %p298, %p299
      %p301 = scmp.ne.s32.totalorder %s293, %s295
      %p302 = scmp.eq.s32.totalorder %s31, 1
      %p303 = por %p301, %p302
      %p304 = scmp.ne.s32.totalorder %s295, %s296
      %p305 = scmp.eq.s32.totalorder %s31, 0
      %p306 = por %p304, %p305
      %p307 = scmp.ne.s32.totalorder %s295, %s296
      %p308 = scmp.eq.s32.totalorder %s32, 1
      %p309 = por %p307, %p308
      %p311 = scmp.ne.s32.totalorder %s296, %s310
      %p312 = scmp.eq.s32.totalorder %s32, 0
      %p313 = por %p311, %p312
      %s315 = sadd.s32 %s314, 1
      %p318 = scmp.eq.s32.totalorder %s26, 1
      %p319 = scmp.ne.s32.totalorder %s314, %s316
      %p320 = scmp.eq.s32.totalorder %s26, 0
      %p321 = por %p319, %p320
      %p322 = scmp.ne.s32.totalorder %s314, %s316
      %p323 = scmp.eq.s32.totalorder %s31, 1
      %p324 = por %p322, %p323
      %p325 = scmp.ne.s32.totalorder %s316, %s317
      %p326 = scmp.eq.s32.totalorder %s31, 0
      %p327 = por %p325, %p326
      %p328 = scmp.ne.s32.totalorder %s316, %s317
      %p329 = scmp.eq.s32.totalorder %s32, 1
      %p330 = por %p328, %p329
      %p332 = scmp.ne.s32.totalorder %s317, %s331
      %p333 = scmp.eq.s32.totalorder %s32, 0
      %p334 = por %p332, %p333
      %s336 = sadd.s32 %s335, 1
      %p339 = scmp.eq.s32.totalorder %s26, 1
      %p340 = scmp.ne.s32.totalorder %s335, %s337
      %p341 = scmp.eq.s32.totalorder %s26, 0
      %p342 = por %p340, %p341
      %p343 = scmp.ne.s32.totalorder %s335, %s337
      %p344 = scmp.eq.s32.totalorder %s31, 1
      %p345 = por %p343, %p344
      %p346 = scmp.ne.s32.totalorder %s337, %s338
      %p347 = scmp.eq.s32.totalorder %s31, 0
      %p348 = por %p346, %p347
      %p349 = scmp.ne.s32.totalorder %s337, %s338
      %p350 = scmp.eq.s32.totalorder %s32, 1
      %p351 = por %p349, %p350
      %p353 = scmp.ne.s32.totalorder %s338, %s352
      %p354 = scmp.eq.s32.totalorder %s32, 0
      %p355 = por %p353, %p354
      %s357 = sadd.s32 %s356, 1
      %p360 = scmp.eq.s32.totalorder %s26, 1
      %p361 = scmp.ne.s32.totalorder %s356, %s358
      %p362 = scmp.eq.s32.totalorder %s26, 0
      %p363 = por %p361, %p362
      %p364 = scmp.ne.s32.totalorder %s356, %s358
      %p365 = scmp.eq.s32.totalorder %s31, 1
      %p366 = por %p364, %p365
      %p367 = scmp.ne.s32.totalorder %s358, %s359
      %p368 = scmp.eq.s32.totalorder %s31, 0
      %p369 = por %p367, %p368
      %p370 = scmp.ne.s32.totalorder %s358, %s359
      %p371 = scmp.eq.s32.totalorder %s32, 1
      %p372 = por %p370, %p371
      %p374 = scmp.ne.s32.totalorder %s359, %s373
      %p375 = scmp.eq.s32.totalorder %s32, 0
      %p376 = por %p374, %p375
      %s377 = ssub.s32 %s33, %s45
      %s378 = ssub.s32 %s34, %s41
      %s379 = sor.u32 %s377, %s378
      %p380 = scmp.eq.s32.totalorder %s379, 0
      %s382 = sadd.s32 %s381, 1
      %s383 = scalar_select %p380, %s381, %s382
      %p386 = pneg %p380
      %p387 = scmp.eq.s32.totalorder %s26, 1
      %p388 = por %p386, %p387
      %p389 = scmp.ne.s32.totalorder %s381, %s384
      %p390 = scmp.eq.s32.totalorder %s26, 0
      %p391 = por %p389, %p390
      %p392 = scmp.ne.s32.totalorder %s381, %s384
      %p393 = scmp.eq.s32.totalorder %s31, 1
      %p394 = por %p392, %p393
      %p395 = scmp.ne.s32.totalorder %s384, %s385
      %p396 = scmp.eq.s32.totalorder %s31, 0
      %p397 = por %p395, %p396
      %p398 = scmp.ne.s32.totalorder %s384, %s385
      %p399 = scmp.eq.s32.totalorder %s32, 1
      %p400 = por %p398, %p399
      %p402 = scmp.ne.s32.totalorder %s385, %s401
      %p403 = scmp.eq.s32.totalorder %s32, 0
      %p404 = por %p402, %p403
      %p405 = scmp.le.s32.totalorder 1, %s26
      %p406 = scmp.lt.s32.totalorder %s26, 3
      %p407 = pnand %p405, %p406
      %p408 = pneg %p407
      // Predicated region
      $region9: #{tpu_custom_call.1} parent=5 // pred_check
        _
      $region10: #{tpu_custom_call.1} parent=5 // pred_check_branch
        %410 = sbr.rel (%p407) target = $region12
      $region11: #{tpu_custom_call.1} parent=5 // pred_region
        %s411 = ssub.s32 %s26, 1
        // Predicated region
        $region13: #{tpu_custom_call.1} parent=11 // pred_check
          %p412 = pneg %p117
        $region14: #{tpu_custom_call.1} parent=11 // pred_check_branch
          %414 = sbr.rel (%p412) target = $region16
        $region15: #{tpu_custom_call.1} parent=11 // pred_region
          _
        $region16: #{tpu_custom_call.1} parent=11 // pred_fallthru
          _
        // Predicated region
        $region17: #{tpu_custom_call.1} parent=11 // pred_check
          %p415 = pneg %p138
        $region18: #{tpu_custom_call.1} parent=11 // pred_check_branch
          %417 = sbr.rel (%p415) target = $region20
        $region19: #{tpu_custom_call.1} parent=11 // pred_region
          _
        $region20: #{tpu_custom_call.1} parent=11 // pred_fallthru
          _
        // Predicated region
        $region21: #{tpu_custom_call.1} parent=11 // pred_check
          %p418 = pneg %p159
        $region22: #{tpu_custom_call.1} parent=11 // pred_check_branch
          %420 = sbr.rel (%p418) target = $region24
        $region23: #{tpu_custom_call.1} parent=11 // pred_region
          _
        $region24: #{tpu_custom_call.1} parent=11 // pred_fallthru
          _
        // Predicated region
        $region25: #{tpu_custom_call.1} parent=11 // pred_check
          %p421 = pneg %p180
        $region26: #{tpu_custom_call.1} parent=11 // pred_check_branch
          %423 = sbr.rel (%p421) target = $region28
        $region27: #{tpu_custom_call.1} parent=11 // pred_region
          _
        $region28: #{tpu_custom_call.1} parent=11 // pred_fallthru
          _
        // Predicated region
        $region29: #{tpu_custom_call.1} parent=11 // pred_check
          %p424 = pneg %p201
        $region30: #{tpu_custom_call.1} parent=11 // pred_check_branch
          %426 = sbr.rel (%p424) target = $region32
        $region31: #{tpu_custom_call.1} parent=11 // pred_region
          _
        $region32: #{tpu_custom_call.1} parent=11 // pred_fallthru
          _
        // Predicated region
        $region33: #{tpu_custom_call.1} parent=11 // pred_check
          %p427 = pneg %p222
        $region34: #{tpu_custom_call.1} parent=11 // pred_check_branch
          %429 = sbr.rel (%p427) target = $region36
        $region35: #{tpu_custom_call.1} parent=11 // pred_region
          _
        $region36: #{tpu_custom_call.1} parent=11 // pred_fallthru
          _
        // Predicated region
        $region37: #{tpu_custom_call.1} parent=11 // pred_check
          %p430 = pneg %p243
        $region38: #{tpu_custom_call.1} parent=11 // pred_check_branch
          %432 = sbr.rel (%p430) target = $region40
        $region39: #{tpu_custom_call.1} parent=11 // pred_region
          _
        $region40: #{tpu_custom_call.1} parent=11 // pred_fallthru
          _
        // Predicated region
        $region41: #{tpu_custom_call.1} parent=11 // pred_check
          %p433 = pneg %p264
        $region42: #{tpu_custom_call.1} parent=11 // pred_check_branch
          %435 = sbr.rel (%p433) target = $region44
        $region43: #{tpu_custom_call.1} parent=11 // pred_region
          %s437 = ssub.s32 2048, 2048
          %438 = vsyncadd [#allocation3], %s437
          %s439 = sshll.u32 [#allocation2], 4
          %s440 = int_to_ptr.vmem [resolvable:$true] %s439
          %445 = dma.hbm_to_vmem [thread:$0]  %s9, 2048, %s440, [#allocation3], 64, 64, 4
        $region44: #{tpu_custom_call.1} parent=11 // pred_fallthru
          _
        // Predicated region
        $region45: #{tpu_custom_call.1} parent=11 // pred_check
          %p446 = pneg %p285
        $region46: #{tpu_custom_call.1} parent=11 // pred_check_branch
          %448 = sbr.rel (%p446) target = $region48
        $region47: #{tpu_custom_call.1} parent=11 // pred_region
          _
        $region48: #{tpu_custom_call.1} parent=11 // pred_fallthru
          _
        // Predicated region
        $region49: #{tpu_custom_call.1} parent=11 // pred_check
          %p449 = pneg %p306
        $region50: #{tpu_custom_call.1} parent=11 // pred_check_branch
          %451 = sbr.rel (%p449) target = $region52
        $region51: #{tpu_custom_call.1} parent=11 // pred_region
          %s453 = ssub.s32 2048, 2048
          %454 = vsyncadd [#allocation6], %s453
          %s455 = sshll.u32 [#allocation5], 4
          %s456 = int_to_ptr.vmem [resolvable:$true] %s455
          %461 = dma.hbm_to_vmem [thread:$0]  %s11, 2048, %s456, [#allocation6], 64, 64, 4
        $region52: #{tpu_custom_call.1} parent=11 // pred_fallthru
          _
        // Predicated region
        $region53: #{tpu_custom_call.1} parent=11 // pred_check
          %p462 = pneg %p327
        $region54: #{tpu_custom_call.1} parent=11 // pred_check_branch
          %464 = sbr.rel (%p462) target = $region56
        $region55: #{tpu_custom_call.1} parent=11 // pred_region
          _
        $region56: #{tpu_custom_call.1} parent=11 // pred_fallthru
          _
        // Predicated region
        $region57: #{tpu_custom_call.1} parent=11 // pred_check
          %p465 = pneg %p348
        $region58: #{tpu_custom_call.1} parent=11 // pred_check_branch
          %467 = sbr.rel (%p465) target = $region60
        $region59: #{tpu_custom_call.1} parent=11 // pred_region
          %s469 = ssub.s32 1024, 1024
          %470 = vsyncadd [#allocation6], %s469
          %s471 = sshll.u32 [#allocation7], 4
          %s472 = int_to_ptr.vmem [resolvable:$true] %s471
          %477 = dma.hbm_to_vmem [thread:$0]  %s13, 1024, %s472, [#allocation6], 64, 64, 4
        $region60: #{tpu_custom_call.1} parent=11 // pred_fallthru
          _
        // Predicated region
        $region61: #{tpu_custom_call.1} parent=11 // pred_check
          %p478 = pneg %p369
        $region62: #{tpu_custom_call.1} parent=11 // pred_check_branch
          %480 = sbr.rel (%p478) target = $region64
        $region63: #{tpu_custom_call.1} parent=11 // pred_region
          _
        $region64: #{tpu_custom_call.1} parent=11 // pred_fallthru
          _
      $region12: #{tpu_custom_call.1} parent=5 // pred_fallthru
        _
      %p481 = scmp.lt.s32.totalorder %s26, 2
      // Predicated region
      $region65: #{tpu_custom_call.1} parent=5 // pred_check
        %p482 = pneg %p481
      $region66: #{tpu_custom_call.1} parent=5 // pred_check_branch
        %484 = sbr.rel (%p482) target = $region68
      $region67: #{tpu_custom_call.1} parent=5 // pred_region
        // Predicated region
        $region69: #{tpu_custom_call.1} parent=67 // pred_check
          %p485 = pneg %p60
        $region70: #{tpu_custom_call.1} parent=67 // pred_check_branch
          %487 = sbr.rel (%p485) target = $region72
        $region71: #{tpu_custom_call.1} parent=67 // pred_region
          %s488 = smul.u32 2, %s34
          %p489 = scmp.lt.s32.totalorder %s33, 1
          %s490 = scalar_select %p489, %s33, 1
          %p491 = scmp.lt.s32.totalorder %s488, 3
          %s492 = scalar_select %p491, %s488, 3
          %s493 = smul.addr %s490, 4
          %s494 = sadd.s32 %s492, %s493
          %s495 = smul.addr %s494, 8
          %s496 = scalar_lea.vmem %s0, %s495
          %s497 = smul.u32 2, %s34
        $region72: #{tpu_custom_call.1} parent=67 // pred_fallthru
          _
        // Predicated region
        $region73: #{tpu_custom_call.1} parent=67 // pred_check
          %p498 = pneg %p90
        $region74: #{tpu_custom_call.1} parent=67 // pred_check_branch
          %500 = sbr.rel (%p498) target = $region76
        $region75: #{tpu_custom_call.1} parent=67 // pred_region
          %s501 = sadd.s32 %s34, 1
          %s502 = smul.u32 2, %s501
          %p503 = scmp.lt.s32.totalorder %s33, 1
          %s504 = scalar_select %p503, %s33, 1
          %p505 = scmp.lt.s32.totalorder %s502, 3
          %s506 = scalar_select %p505, %s502, 3
          %s507 = smul.addr %s504, 4
          %s508 = sadd.s32 %s506, %s507
          %s509 = smul.addr %s508, 8
          %s510 = scalar_lea.vmem %s1, %s509
          %s511 = sadd.s32 %s34, 1
          %s512 = smul.u32 2, %s511
        $region76: #{tpu_custom_call.1} parent=67 // pred_fallthru
          _
      $region68: #{tpu_custom_call.1} parent=5 // pred_fallthru
        _
      %p513 = scmp.le.s32.totalorder 1, %s26
      %p514 = scmp.lt.s32.totalorder %s26, 3
      %p515 = pnand %p513, %p514
      %p516 = pneg %p515
      // Predicated region
      $region77: #{tpu_custom_call.1} parent=5 // pred_check
        _
      $region78: #{tpu_custom_call.1} parent=5 // pred_check_branch
        %518 = sbr.rel (%p515) target = $region80
      $region79: #{tpu_custom_call.1} parent=5 // pred_region
        %s519 = ssub.s32 %s26, 1
        // Predicated region
        $region81: #{tpu_custom_call.1} parent=79 // pred_check
          %p520 = pneg %p264
        $region82: #{tpu_custom_call.1} parent=79 // pred_check_branch
          %522 = sbr.rel (%p520) target = $region84
        $region83: #{tpu_custom_call.1} parent=79 // pred_region
          %523 = dma.done [#allocation3], 2048
        $region84: #{tpu_custom_call.1} parent=79 // pred_fallthru
          _
        // Predicated region
        $region85: #{tpu_custom_call.1} parent=79 // pred_check
          %p524 = pneg %p306
        $region86: #{tpu_custom_call.1} parent=79 // pred_check_branch
          %526 = sbr.rel (%p524) target = $region88
        $region87: #{tpu_custom_call.1} parent=79 // pred_region
          %527 = dma.done [#allocation6], 2048
        $region88: #{tpu_custom_call.1} parent=79 // pred_fallthru
          _
        // Predicated region
        $region89: #{tpu_custom_call.1} parent=79 // pred_check
          %p528 = pneg %p348
        $region90: #{tpu_custom_call.1} parent=79 // pred_check_branch
          %530 = sbr.rel (%p528) target = $region92
        $region91: #{tpu_custom_call.1} parent=79 // pred_region
          %531 = dma.done [#allocation6], 1024
        $region92: #{tpu_custom_call.1} parent=79 // pred_fallthru
          _
        %s532 = smul.u32 2, %s36
        %p533 = scmp.lt.s32.totalorder %s35, 1
        %s534 = scalar_select %p533, %s35, 1
        %p535 = scmp.lt.s32.totalorder %s532, 3
        %s536 = scalar_select %p535, %s532, 3
        %s537 = smul.addr %s534, 4
        %s538 = sadd.s32 %s536, %s537
        %s539 = smul.addr %s538, 8
        %s540 = scalar_lea.vmem %s0, %s539
        %p541 = pneg %p66
        %p542 = pneg %p63
        %s543 = sadd.s32 %s36, 1
        %s544 = smul.u32 2, %s543
        %p545 = scmp.lt.s32.totalorder %s35, 1
        %s546 = scalar_select %p545, %s35, 1
        %p547 = scmp.lt.s32.totalorder %s544, 3
        %s548 = scalar_select %p547, %s544, 3
        %s549 = smul.addr %s546, 4
        %s550 = sadd.s32 %s548, %s549
        %s551 = smul.addr %s550, 8
        %s552 = scalar_lea.vmem %s1, %s551
        %p553 = pneg %p96
        %p554 = pneg %p93
        %p555 = pneg %p117
        %p556 = pneg %p114
        %p557 = pneg %p138
        %p558 = pneg %p135
        %p559 = pneg %p159
        %p560 = pneg %p156
        %p561 = pneg %p180
        %p562 = pneg %p177
        %p563 = pneg %p201
        %p564 = pneg %p198
        %p565 = pneg %p222
        %p566 = pneg %p219
        %p567 = pneg %p243
        %p568 = pneg %p240
        %p569 = pneg %p264
        %p570 = pneg %p261
        %p571 = pneg %p285
        %p572 = pneg %p282
        %p573 = pneg %p306
        %p574 = pneg %p303
        %p575 = pneg %p327
        %p576 = pneg %p324
        %p577 = pneg %p348
        %p578 = pneg %p345
        %p579 = pneg %p369
        %p580 = pneg %p366
        %p581 = pneg %p397
        %p582 = pneg %p394
        %s583 = sand.u32 %s384, 1
        %s584 = scalar_lea.sflag [#allocation4], %s583
        %s585 = sand.u32 %s384, 1
        %s586 = smul.addr %s585, 16
        %s587 = scalar_lea.vmem [#allocation8], %s586
        %s588 = smul.u32 2, %s36
        %p589 = scmp.lt.s32.totalorder %s35, 1
        %s590 = scalar_select %p589, %s35, 1
        %p591 = scmp.lt.s32.totalorder %s588, 3
        %s592 = scalar_select %p591, %s588, 3
        %s593 = smul.addr %s590, 4
        %s594 = sadd.s32 %s592, %s593
        %s595 = smul.addr %s594, 8
        %s596 = scalar_lea.vmem %s0, %s595
        %s597 = smul.u32 2, %s36
        %s598 = sadd.s32 %s36, 1
        %s599 = smul.u32 2, %s598
        %p600 = scmp.lt.s32.totalorder %s35, 1
        %s601 = scalar_select %p600, %s35, 1
        %p602 = scmp.lt.s32.totalorder %s599, 3
        %s603 = scalar_select %p602, %s599, 3
        %s604 = smul.addr %s601, 4
        %s605 = sadd.s32 %s603, %s604
        %s606 = smul.addr %s605, 8
        %s607 = scalar_lea.vmem %s1, %s606
        %s608 = sadd.s32 %s36, 1
        %s609 = smul.u32 2, %s608
        %s610 = smul.u32 2, %s36
        %v612 = vld [vmem:[%s596 + $0x8] sm:$0xff]
        %v613 = vld [vmem:[%s607] sm:$0xff]
        %v614 = vld [vmem:[%s607 + $0x8] sm:$0xff]
        %v615 = vlaneseq
        %v616 = vshrl.u32 %v615, 7
        %v617 = vadd.s32 %v616, 8
        %v618 = vadd.s32 %v616, 16
        %v619 = vld [vmem:[%s2] sm:$0xf]
        %v620 = vld [vmem:[%s3] sm:$0xf]
        %v621 = vld [vmem:[%s4] sm:$0x1]
        %v622 = vld [vmem:[%s5] sm:$0xf]
        %v623 = vld [vmem:[%s5 + $0x4] sm:$0xf]
        %v624 = vld [vmem:[%s5 + $0x8] sm:$0xf]
        %v625 = vld [vmem:[%s5 + $0xc] sm:$0xf]
        %v626 = vld [vmem:[%s5 + $0x10] sm:$0xf]
        %v627 = vld [vmem:[%s5 + $0x14] sm:$0xf]
        %v628 = vld [vmem:[%s5 + $0x18] sm:$0xf]
        %v629 = vld [vmem:[%s5 + $0x1c] sm:$0xf]
        %v630 = vld [vmem:[%s5 + $0x20] sm:$0xf]
        %v631 = vld [vmem:[%s5 + $0x24] sm:$0xf]
        %v632 = vld [vmem:[%s5 + $0x28] sm:$0xf]
        %v633 = vld [vmem:[%s5 + $0x2c] sm:$0xf]
        %v634 = vld [vmem:[%s5 + $0x30] sm:$0xf]
        %v635 = vld [vmem:[%s5 + $0x34] sm:$0xf]
        %v636 = vld [vmem:[%s5 + $0x38] sm:$0xf]
        %v637 = vld [vmem:[%s5 + $0x3c] sm:$0xf]
        %v638 = vld [vmem:[%s5 + $0x40] sm:$0xf]
        %v639 = vld [vmem:[%s5 + $0x44] sm:$0xf]
        %v640 = vld [vmem:[%s5 + $0x48] sm:$0xf]
        %v641 = vld [vmem:[%s5 + $0x4c] sm:$0xf]
        %v642 = vld [vmem:[%s5 + $0x50] sm:$0xf]
        %v643 = vld [vmem:[%s5 + $0x54] sm:$0xf]
        %v644 = vld [vmem:[%s5 + $0x58] sm:$0xf]
        %v645 = vld [vmem:[%s5 + $0x5c] sm:$0xf]
        %v646 = vld [vmem:[%s5 + $0x60] sm:$0xf]
        %v647 = vld [vmem:[%s5 + $0x64] sm:$0xf]
        %v648 = vld [vmem:[%s5 + $0x68] sm:$0xf]
        %v649 = vld [vmem:[%s5 + $0x6c] sm:$0xf]
        %v650 = vld [vmem:[%s5 + $0x70] sm:$0xf]
        %v651 = vld [vmem:[%s5 + $0x74] sm:$0xf]
        %v652 = vld [vmem:[%s5 + $0x78] sm:$0xf]
        %v653 = vld [vmem:[%s5 + $0x7c] sm:$0xf]
        %v654 = vld [vmem:[%s6] sm:$0x1]
        %v655 = vld [vmem:[%s7] sm:$0xf]
        %v656 = vld [vmem:[%s8] sm:$0x1]
        %v657 = vpack.c.bf16 %v613, %v612
        %v658 = vpack.c.bf16 %v614, %v614
        %vm659 = vcmp.ge.s32.totalorder %v616, 1
        %vm660 = vcmp.ge.s32.totalorder %v617, 1
        %vm661 = vcmp.ge.s32.totalorder %v618, 1
        %v662 = vrot.slane %v612, 7
        %v663 = vrot.slane %v613, 7
        %v664 = vrot.slane %v614, 7
        %vm665 = vcmp.lt.s32.totalorder %v616, 1
        %v666 = vsel %vm665, %v663, %v664
        %v667 = vsel %vm665, %v662, %v663
        %v668 = vsel %vm665, %v664, %v662
        %v669 = vsel %vm659, 1, 0
        %v670 = vsel %vm660, 1, 0
        %v671 = vsel %vm661, 1, 0
        %vm672 = vcmp.eq.s32.totalorder %v669, 1
        %vm673 = vcmp.eq.s32.totalorder %v670, 1
        %vm674 = vcmp.eq.s32.totalorder %v671, 1
        %v675 = vsel %vm672, %v668, 0.0
        %v676 = vsel %vm673, %v667, 0.0
        %v677 = vsel %vm674, %v666, 0.0
        %v678 = vpack.c.bf16 %v676, %v675
        %v679 = vpack.c.bf16 %v677, %v677
        %vm680 = vcmask 64512
        %v682 = vsel %vm680, %v678, 0
        %v685 = vsel %vm680, %v679, 0
        %vm687 = vcmask 1043456
        %v689 = vsel %vm687, %v620, 0
        %691 = vmatprep.subr.bf16.mxu0 0
        %692 = vmatpush1.bf16.msra.mxu0 0
        %693 = vmatprep.subr.bf16.mxu0 0
        %694 = vmatpush1.bf16.msra.mxu0 0
        %695 = vmatprep.subr.bf16.mxu0 0
        %696 = vmatpush1.bf16.msra.mxu0 0
        %697 = vmatprep.subr.bf16.mxu0 0
        %698 = vmatpush1.bf16.msra.mxu0 0
        %699 = vmatprep.subr.bf16.mxu0 0
        %700 = vmatpush1.bf16.msra.mxu0 0
        %701 = vmatprep.subr.bf16.mxu0 0
        %702 = vmatpush1.bf16.msra.mxu0 0
        %703 = vmatprep.subr.bf16.mxu0 0
        %704 = vmatpush1.bf16.msra.mxu0 0
        %705 = vmatprep.subr.bf16.mxu0 0
        %706 = vmatpush1.bf16.msra.mxu0 %v689
        %707 = vmatprep.subr.bf16.mxu0 0
        %708 = vmatpush2.bf16.msra.mxu0 0
        %709 = vmatprep.subr.bf16.mxu0 0
        %710 = vmatpush2.bf16.msra.mxu0 0
        %711 = vmatprep.subr.bf16.mxu0 0
        %712 = vmatpush2.bf16.msra.mxu0 0
        %713 = vmatprep.subr.bf16.mxu0 0
        %714 = vmatpush2.bf16.msra.mxu0 0
        %715 = vmatprep.subr.bf16.mxu0 0
        %716 = vmatpush2.bf16.msra.mxu0 0
        %717 = vmatprep.subr.bf16.mxu0 0
        %718 = vmatpush2.bf16.msra.mxu0 0
        %719 = vmatprep.subr.bf16.mxu0 0
        %720 = vmatpush2.bf16.msra.mxu0 0
        %721 = vmatprep.subr.bf16.mxu0 0
        %722 = vmatpush2.bf16.msra.mxu0 0
        %723 = vmatprep.mubr.bf16.mxu0 0
        %724 = vmatmul.mubr.bf16.gmra.mxu0 %v682
        %v725 = vpop.f32.mrf.mxu0
        %v726 = vadd.f32 0.0, %v725
        %v727 = vpop.f32.mrf.mxu0
        %v728 = vpop.f32.mrf.mxu0
        %v729 = vadd.f32 0.0, %v728
        %v730 = vpop.f32.mrf.mxu0
        %731 = vmatprep.mubr.bf16.mxu0 0
        %732 = vmatmul.mubr.bf16.gmra.mxu0 %v685
        %v733 = vpop.f32.mrf.mxu0
        %v734 = vadd.f32 0.0, %v733
        %v735 = vpop.f32.mrf.mxu0
        %v736 = vpop.f32.mrf.mxu0
        %v737 = vpop.f32.mrf.mxu0
        %738 = vdwg.mxu0
        %v740 = vsel %vm680, %v657, 0
        %v743 = vsel %vm680, %v658, 0
        %v746 = vsel %vm687, %v619, 0
        %748 = vmatprep.subr.bf16.mxu0 0
        %749 = vmatpush1.bf16.msra.mxu0 0
        %750 = vmatprep.subr.bf16.mxu0 0
        %751 = vmatpush1.bf16.msra.mxu0 0
        %752 = vmatprep.subr.bf16.mxu0 0
        %753 = vmatpush1.bf16.msra.mxu0 0
        %754 = vmatprep.subr.bf16.mxu0 0
        %755 = vmatpush1.bf16.msra.mxu0 0
        %756 = vmatprep.subr.bf16.mxu0 0
        %757 = vmatpush1.bf16.msra.mxu0 0
        %758 = vmatprep.subr.bf16.mxu0 0
        %759 = vmatpush1.bf16.msra.mxu0 0
        %760 = vmatprep.subr.bf16.mxu0 0
        %761 = vmatpush1.bf16.msra.mxu0 0
        %762 = vmatprep.subr.bf16.mxu0 0
        %763 = vmatpush1.bf16.msra.mxu0 %v746
        %764 = vmatprep.subr.bf16.mxu0 0
        %765 = vmatpush2.bf16.msra.mxu0 0
        %766 = vmatprep.subr.bf16.mxu0 0
        %767 = vmatpush2.bf16.msra.mxu0 0
        %768 = vmatprep.subr.bf16.mxu0 0
        %769 = vmatpush2.bf16.msra.mxu0 0
        %770 = vmatprep.subr.bf16.mxu0 0
        %771 = vmatpush2.bf16.msra.mxu0 0
        %772 = vmatprep.subr.bf16.mxu0 0
        %773 = vmatpush2.bf16.msra.mxu0 0
        %774 = vmatprep.subr.bf16.mxu0 0
        %775 = vmatpush2.bf16.msra.mxu0 0
        %776 = vmatprep.subr.bf16.mxu0 0
        %777 = vmatpush2.bf16.msra.mxu0 0
        %778 = vmatprep.subr.bf16.mxu0 0
        %779 = vmatpush2.bf16.msra.mxu0 0
        %780 = vmatprep.mubr.bf16.mxu0 0
        %781 = vmatmul.mubr.bf16.gmra.mxu0 %v740
        %v782 = vpop.f32.mrf.mxu0
        %v783 = vadd.f32 %v726, %v782
        %v784 = vpop.f32.mrf.mxu0
        %v785 = vpop.f32.mrf.mxu0
        %v786 = vadd.f32 %v729, %v785
        %v787 = vpop.f32.mrf.mxu0
        %788 = vmatprep.mubr.bf16.mxu0 0
        %789 = vmatmul.mubr.bf16.gmra.mxu0 %v743
        %v790 = vpop.f32.mrf.mxu0
        %v791 = vadd.f32 %v734, %v790
        %v792 = vpop.f32.mrf.mxu0
        %v793 = vpop.f32.mrf.mxu0
        %v794 = vpop.f32.mrf.mxu0
        %795 = vdwg.mxu0
        %v797 = vlaneseq
        %v798 = vshrl.u32 %v797, 7
        %v799 = vsub.s32 0, %v798
        %v800 = vrot.slane %v621, %v799
        %v802 = vadd.f32 %v783, %v800
        %v803 = vadd.f32 %v786, %v800
        %v804 = vadd.f32 %v791, %v800
        %v805 = vmax.f32 %v802, 0.0
        %v806 = vmax.f32 %v803, 0.0
        %v807 = vmax.f32 %v804, 0.0
        %v808 = vrot.slane %v805, 7
        %v809 = vrot.slane %v806, 7
        %v810 = vrot.slane %v807, 7
        %v811 = vsel %vm665, %v809, %v810
        %v812 = vsel %vm665, %v808, %v809
        %v813 = vsel %vm665, %v810, %v808
        %v814 = vsel %vm672, %v813, 0.0
        %v815 = vsel %vm673, %v812, 0.0
        %v816 = vsel %vm674, %v811, 0.0
        %v817 = vpack.c.bf16 %v806, %v805
        %v818 = vpack.c.bf16 %v815, %v814
        %v819 = vpack.c.bf16 %v807, %v807
        %v820 = vpack.c.bf16 %v816, %v816
        %v822 = vlaneseq
        %v823 = vshrl.u32 %v822, 7
        %v824 = vsub.s32 0, %v823
        %v825 = vrot.slane %v654, %v824
        %v859 = vunpack.c.l.b16 %v622
        %v860 = vunpack.c.l.b16 %v623
        %v861 = vunpack.c.l.b16 %v624
        %v862 = vunpack.c.l.b16 %v625
        %v863 = vunpack.c.l.b16 %v626
        %v864 = vunpack.c.l.b16 %v627
        %v865 = vunpack.c.l.b16 %v628
        %v866 = vunpack.c.l.b16 %v629
        %v867 = vunpack.c.l.b16 %v630
        %v868 = vunpack.c.l.b16 %v631
        %v869 = vunpack.c.l.b16 %v632
        %v870 = vunpack.c.l.b16 %v633
        %v871 = vunpack.c.l.b16 %v634
        %v872 = vunpack.c.l.b16 %v635
        %v873 = vunpack.c.l.b16 %v636
        %v874 = vunpack.c.l.b16 %v637
        %v875 = vunpack.c.l.b16 %v638
        %v876 = vunpack.c.l.b16 %v639
        %v877 = vunpack.c.l.b16 %v640
        %v878 = vunpack.c.l.b16 %v641
        %v879 = vunpack.c.l.b16 %v642
        %v880 = vunpack.c.l.b16 %v643
        %v881 = vunpack.c.l.b16 %v644
        %v882 = vunpack.c.l.b16 %v645
        %v883 = vunpack.c.l.b16 %v646
        %v884 = vunpack.c.l.b16 %v647
        %v885 = vunpack.c.l.b16 %v648
        %v886 = vunpack.c.l.b16 %v649
        %v887 = vunpack.c.l.b16 %v650
        %v888 = vunpack.c.l.b16 %v651
        %v889 = vunpack.c.l.b16 %v652
        %v890 = vunpack.c.l.b16 %v653
        %v891 = vpack.c.b16 %v860, %v859
        %v892 = vpack.c.b16 %v862, %v861
        %v893 = vpack.c.b16 %v864, %v863
        %v894 = vpack.c.b16 %v866, %v865
        %v895 = vpack.c.b16 %v868, %v867
        %v896 = vpack.c.b16 %v870, %v869
        %v897 = vpack.c.b16 %v872, %v871
        %v898 = vpack.c.b16 %v874, %v873
        %v899 = vpack.c.b16 %v876, %v875
        %v900 = vpack.c.b16 %v878, %v877
        %v901 = vpack.c.b16 %v880, %v879
        %v902 = vpack.c.b16 %v882, %v881
        %v903 = vpack.c.b16 %v884, %v883
        %v904 = vpack.c.b16 %v886, %v885
        %v905 = vpack.c.b16 %v888, %v887
        %v906 = vpack.c.b16 %v890, %v889
        %923 = vmatprep.subr.bf16.mxu0 0
        %924 = vmatpush1.bf16.msra.mxu0 %v898
        %925 = vmatprep.subr.bf16.mxu0 0
        %926 = vmatpush1.bf16.msra.mxu0 %v897
        %927 = vmatprep.subr.bf16.mxu0 0
        %928 = vmatpush1.bf16.msra.mxu0 %v896
        %929 = vmatprep.subr.bf16.mxu0 0
        %930 = vmatpush1.bf16.msra.mxu0 %v895
        %931 = vmatprep.subr.bf16.mxu0 0
        %932 = vmatpush1.bf16.msra.mxu0 %v894
        %933 = vmatprep.subr.bf16.mxu0 0
        %934 = vmatpush1.bf16.msra.mxu0 %v893
        %935 = vmatprep.subr.bf16.mxu0 0
        %936 = vmatpush1.bf16.msra.mxu0 %v892
        %937 = vmatprep.subr.bf16.mxu0 0
        %938 = vmatpush1.bf16.msra.mxu0 %v891
        %939 = vmatprep.subr.bf16.mxu0 0
        %940 = vmatpush2.bf16.msra.mxu0 %v906
        %941 = vmatprep.subr.bf16.mxu0 0
        %942 = vmatpush2.bf16.msra.mxu0 %v905
        %943 = vmatprep.subr.bf16.mxu0 0
        %944 = vmatpush2.bf16.msra.mxu0 %v904
        %945 = vmatprep.subr.bf16.mxu0 0
        %946 = vmatpush2.bf16.msra.mxu0 %v903
        %947 = vmatprep.subr.bf16.mxu0 0
        %948 = vmatpush2.bf16.msra.mxu0 %v902
        %949 = vmatprep.subr.bf16.mxu0 0
        %950 = vmatpush2.bf16.msra.mxu0 %v901
        %951 = vmatprep.subr.bf16.mxu0 0
        %952 = vmatpush2.bf16.msra.mxu0 %v900
        %953 = vmatprep.subr.bf16.mxu0 0
        %954 = vmatpush2.bf16.msra.mxu0 %v899
        %955 = vmatprep.mubr.bf16.mxu0 %v818
        %956 = vmatmul.mubr.bf16.gmra.mxu0 %v817
        %v957 = vpop.f32.mrf.mxu0
        %v958 = vadd.f32 %v825, %v957
        %v959 = vpop.f32.mrf.mxu0
        %v960 = vpop.f32.mrf.mxu0
        %v961 = vadd.f32 %v825, %v960
        %v962 = vpop.f32.mrf.mxu0
        %963 = vmatprep.mubr.bf16.mxu0 %v820
        %964 = vmatmul.mubr.bf16.gmra.mxu0 %v819
        %v965 = vpop.f32.mrf.mxu0
        %v966 = vadd.f32 %v825, %v965
        %v967 = vpop.f32.mrf.mxu0
        %v968 = vpop.f32.mrf.mxu0
        %v969 = vpop.f32.mrf.mxu0
        %970 = vdwg.mxu0
        %v971 = vmax.f32 %v958, 0.0
        %v972 = vmax.f32 %v961, 0.0
        %v973 = vmax.f32 %v966, 0.0
        %v975 = vlaneseq
        %v976 = vshrl.u32 %v975, 7
        %v977 = vsub.s32 0, %v976
        %v978 = vrot.slane %v656, %v977
        %v981 = vsel %vm687, %v655, 0
        %983 = vmatprep.subr.bf16.mxu0 0
        %984 = vmatpush1.bf16.msra.mxu0 0
        %985 = vmatprep.subr.bf16.mxu0 0
        %986 = vmatpush1.bf16.msra.mxu0 0
        %987 = vmatprep.subr.bf16.mxu0 0
        %988 = vmatpush1.bf16.msra.mxu0 0
        %989 = vmatprep.subr.bf16.mxu0 0
        %990 = vmatpush1.bf16.msra.mxu0 0
        %991 = vmatprep.subr.bf16.mxu0 0
        %992 = vmatpush1.bf16.msra.mxu0 0
        %993 = vmatprep.subr.bf16.mxu0 0
        %994 = vmatpush1.bf16.msra.mxu0 0
        %995 = vmatprep.subr.bf16.mxu0 0
        %996 = vmatpush1.bf16.msra.mxu0 0
        %997 = vmatprep.subr.bf16.mxu0 0
        %998 = vmatpush1.bf16.msra.mxu0 %v981
        %999 = vmatprep.subr.bf16.mxu0 0
        %1000 = vmatpush2.bf16.msra.mxu0 0
        %1001 = vmatprep.subr.bf16.mxu0 0
        %1002 = vmatpush2.bf16.msra.mxu0 0
        %1003 = vmatprep.subr.bf16.mxu0 0
        %1004 = vmatpush2.bf16.msra.mxu0 0
        %1005 = vmatprep.subr.bf16.mxu0 0
        %1006 = vmatpush2.bf16.msra.mxu0 0
        %1007 = vmatprep.subr.bf16.mxu0 0
        %1008 = vmatpush2.bf16.msra.mxu0 0
        %1009 = vmatprep.subr.bf16.mxu0 0
        %1010 = vmatpush2.bf16.msra.mxu0 0
        %1011 = vmatprep.subr.bf16.mxu0 0
        %1012 = vmatpush2.bf16.msra.mxu0 0
        %1013 = vmatprep.subr.bf16.mxu0 0
        %1014 = vmatpush2.bf16.msra.mxu0 0
        %1015 = vmatprep.mubr.bf16.mxu0 0
        %1016 = vmatmul.mubr.bf16.gmra.mxu0 %v740
        %v1017 = vpop.f32.mrf.mxu0
        %v1018 = vadd.f32 %v978, %v1017
        %v1019 = vpop.f32.mrf.mxu0
        %v1020 = vpop.f32.mrf.mxu0
        %v1021 = vadd.f32 %v978, %v1020
        %v1022 = vpop.f32.mrf.mxu0
        %1023 = vmatprep.mubr.bf16.mxu0 0
        %1024 = vmatmul.mubr.bf16.gmra.mxu0 %v743
        %v1025 = vpop.f32.mrf.mxu0
        %v1026 = vadd.f32 %v978, %v1025
        %v1027 = vpop.f32.mrf.mxu0
        %v1028 = vpop.f32.mrf.mxu0
        %v1029 = vpop.f32.mrf.mxu0
        %1030 = vdwg.mxu0
        %v1031 = vadd.f32 %v971, %v1018
        %v1032 = vadd.f32 %v972, %v1021
        %v1033 = vadd.f32 %v973, %v1026
        %v1034 = vmax.f32 %v1031, 0.0
        %v1035 = vmax.f32 %v1032, 0.0
        %v1036 = vmax.f32 %v1033, 0.0
        %v1037 = vld [vmem:[#allocation2] sm:$0xf]
        %v1038 = vld [vmem:[#allocation2 + $0x4] sm:$0xf]
        %v1039 = vld [vmem:[#allocation2 + $0x8] sm:$0xf]
        %v1040 = vld [vmem:[#allocation2 + $0xc] sm:$0xf]
        %v1041 = vld [vmem:[#allocation2 + $0x10] sm:$0xf]
        %v1042 = vld [vmem:[#allocation2 + $0x14] sm:$0xf]
        %v1043 = vld [vmem:[#allocation2 + $0x18] sm:$0xf]
        %v1044 = vld [vmem:[#allocation2 + $0x1c] sm:$0xf]
        %v1045 = vld [vmem:[#allocation2 + $0x20] sm:$0xf]
        %v1046 = vld [vmem:[#allocation2 + $0x24] sm:$0xf]
        %v1047 = vld [vmem:[#allocation2 + $0x28] sm:$0xf]
        %v1048 = vld [vmem:[#allocation2 + $0x2c] sm:$0xf]
        %v1049 = vld [vmem:[#allocation2 + $0x30] sm:$0xf]
        %v1050 = vld [vmem:[#allocation2 + $0x34] sm:$0xf]
        %v1051 = vld [vmem:[#allocation2 + $0x38] sm:$0xf]
        %v1052 = vld [vmem:[#allocation2 + $0x3c] sm:$0xf]
        %v1053 = vld [vmem:[#allocation2 + $0x40] sm:$0xf]
        %v1054 = vld [vmem:[#allocation2 + $0x44] sm:$0xf]
        %v1055 = vld [vmem:[#allocation2 + $0x48] sm:$0xf]
        %v1056 = vld [vmem:[#allocation2 + $0x4c] sm:$0xf]
        %v1057 = vld [vmem:[#allocation2 + $0x50] sm:$0xf]
        %v1058 = vld [vmem:[#allocation2 + $0x54] sm:$0xf]
        %v1059 = vld [vmem:[#allocation2 + $0x58] sm:$0xf]
        %v1060 = vld [vmem:[#allocation2 + $0x5c] sm:$0xf]
        %v1061 = vld [vmem:[#allocation2 + $0x60] sm:$0xf]
        %v1062 = vld [vmem:[#allocation2 + $0x64] sm:$0xf]
        %v1063 = vld [vmem:[#allocation2 + $0x68] sm:$0xf]
        %v1064 = vld [vmem:[#allocation2 + $0x6c] sm:$0xf]
        %v1065 = vld [vmem:[#allocation2 + $0x70] sm:$0xf]
        %v1066 = vld [vmem:[#allocation2 + $0x74] sm:$0xf]
        %v1067 = vld [vmem:[#allocation2 + $0x78] sm:$0xf]
        %v1068 = vld [vmem:[#allocation2 + $0x7c] sm:$0xf]
        %v1069 = vld [vmem:[%s10] sm:$0x1]
        %v1070 = vld [vmem:[#allocation5] sm:$0xf]
        %v1071 = vld [vmem:[#allocation5 + $0x4] sm:$0xf]
        %v1072 = vld [vmem:[#allocation5 + $0x8] sm:$0xf]
        %v1073 = vld [vmem:[#allocation5 + $0xc] sm:$0xf]
        %v1074 = vld [vmem:[#allocation5 + $0x10] sm:$0xf]
        %v1075 = vld [vmem:[#allocation5 + $0x14] sm:$0xf]
        %v1076 = vld [vmem:[#allocation5 + $0x18] sm:$0xf]
        %v1077 = vld [vmem:[#allocation5 + $0x1c] sm:$0xf]
        %v1078 = vld [vmem:[#allocation5 + $0x20] sm:$0xf]
        %v1079 = vld [vmem:[#allocation5 + $0x24] sm:$0xf]
        %v1080 = vld [vmem:[#allocation5 + $0x28] sm:$0xf]
        %v1081 = vld [vmem:[#allocation5 + $0x2c] sm:$0xf]
        %v1082 = vld [vmem:[#allocation5 + $0x30] sm:$0xf]
        %v1083 = vld [vmem:[#allocation5 + $0x34] sm:$0xf]
        %v1084 = vld [vmem:[#allocation5 + $0x38] sm:$0xf]
        %v1085 = vld [vmem:[#allocation5 + $0x3c] sm:$0xf]
        %v1086 = vld [vmem:[#allocation5 + $0x40] sm:$0xf]
        %v1087 = vld [vmem:[#allocation5 + $0x44] sm:$0xf]
        %v1088 = vld [vmem:[#allocation5 + $0x48] sm:$0xf]
        %v1089 = vld [vmem:[#allocation5 + $0x4c] sm:$0xf]
        %v1090 = vld [vmem:[#allocation5 + $0x50] sm:$0xf]
        %v1091 = vld [vmem:[#allocation5 + $0x54] sm:$0xf]
        %v1092 = vld [vmem:[#allocation5 + $0x58] sm:$0xf]
        %v1093 = vld [vmem:[#allocation5 + $0x5c] sm:$0xf]
        %v1094 = vld [vmem:[#allocation5 + $0x60] sm:$0xf]
        %v1095 = vld [vmem:[#allocation5 + $0x64] sm:$0xf]
        %v1096 = vld [vmem:[#allocation5 + $0x68] sm:$0xf]
        %v1097 = vld [vmem:[#allocation5 + $0x6c] sm:$0xf]
        %v1098 = vld [vmem:[#allocation5 + $0x70] sm:$0xf]
        %v1099 = vld [vmem:[#allocation5 + $0x74] sm:$0xf]
        %v1100 = vld [vmem:[#allocation5 + $0x78] sm:$0xf]
        %v1101 = vld [vmem:[#allocation5 + $0x7c] sm:$0xf]
        %v1102 = vld [vmem:[%s12] sm:$0x1]
        %vm1103 = vcmp.ge.s32.totalorder %v616, 2
        %vm1104 = vcmp.ge.s32.totalorder %v617, 2
        %vm1105 = vcmp.ge.s32.totalorder %v618, 2
        %v1106 = vrot.slane %v1034, 6
        %v1107 = vrot.slane %v1035, 6
        %v1108 = vrot.slane %v1036, 6
        %vm1109 = vcmp.lt.s32.totalorder %v616, 2
        %v1110 = vsel %vm1109, %v1107, %v1108
        %v1111 = vsel %vm1109, %v1106, %v1107
        %v1112 = vsel %vm1109, %v1108, %v1106
        %v1113 = vsel %vm1103, 1, 0
        %v1114 = vsel %vm1104, 1, 0
        %v1115 = vsel %vm1105, 1, 0
        %vm1116 = vcmp.eq.s32.totalorder %v1113, 1
        %vm1117 = vcmp.eq.s32.totalorder %v1114, 1
        %vm1118 = vcmp.eq.s32.totalorder %v1115, 1
        %v1119 = vsel %vm1116, %v1112, 0.0
        %v1120 = vsel %vm1117, %v1111, 0.0
        %v1121 = vsel %vm1118, %v1110, 0.0
        %v1122 = vpack.c.bf16 %v1035, %v1034
        %v1123 = vpack.c.bf16 %v1120, %v1119
        %v1124 = vpack.c.bf16 %v1036, %v1036
        %v1125 = vpack.c.bf16 %v1121, %v1121
        %v1127 = vlaneseq
        %v1128 = vshrl.u32 %v1127, 7
        %v1129 = vsub.s32 0, %v1128
        %v1130 = vrot.slane %v1069, %v1129
        %v1164 = vunpack.c.l.b16 %v1037
        %v1165 = vunpack.c.l.b16 %v1038
        %v1166 = vunpack.c.l.b16 %v1039
        %v1167 = vunpack.c.l.b16 %v1040
        %v1168 = vunpack.c.l.b16 %v1041
        %v1169 = vunpack.c.l.b16 %v1042
        %v1170 = vunpack.c.l.b16 %v1043
        %v1171 = vunpack.c.l.b16 %v1044
        %v1172 = vunpack.c.l.b16 %v1045
        %v1173 = vunpack.c.l.b16 %v1046
        %v1174 = vunpack.c.l.b16 %v1047
        %v1175 = vunpack.c.l.b16 %v1048
        %v1176 = vunpack.c.l.b16 %v1049
        %v1177 = vunpack.c.l.b16 %v1050
        %v1178 = vunpack.c.l.b16 %v1051
        %v1179 = vunpack.c.l.b16 %v1052
        %v1180 = vunpack.c.l.b16 %v1053
        %v1181 = vunpack.c.l.b16 %v1054
        %v1182 = vunpack.c.l.b16 %v1055
        %v1183 = vunpack.c.l.b16 %v1056
        %v1184 = vunpack.c.l.b16 %v1057
        %v1185 = vunpack.c.l.b16 %v1058
        %v1186 = vunpack.c.l.b16 %v1059
        %v1187 = vunpack.c.l.b16 %v1060
        %v1188 = vunpack.c.l.b16 %v1061
        %v1189 = vunpack.c.l.b16 %v1062
        %v1190 = vunpack.c.l.b16 %v1063
        %v1191 = vunpack.c.l.b16 %v1064
        %v1192 = vunpack.c.l.b16 %v1065
        %v1193 = vunpack.c.l.b16 %v1066
        %v1194 = vunpack.c.l.b16 %v1067
        %v1195 = vunpack.c.l.b16 %v1068
        %v1196 = vpack.c.b16 %v1165, %v1164
        %v1197 = vpack.c.b16 %v1167, %v1166
        %v1198 = vpack.c.b16 %v1169, %v1168
        %v1199 = vpack.c.b16 %v1171, %v1170
        %v1200 = vpack.c.b16 %v1173, %v1172
        %v1201 = vpack.c.b16 %v1175, %v1174
        %v1202 = vpack.c.b16 %v1177, %v1176
        %v1203 = vpack.c.b16 %v1179, %v1178
        %v1204 = vpack.c.b16 %v1181, %v1180
        %v1205 = vpack.c.b16 %v1183, %v1182
        %v1206 = vpack.c.b16 %v1185, %v1184
        %v1207 = vpack.c.b16 %v1187, %v1186
        %v1208 = vpack.c.b16 %v1189, %v1188
        %v1209 = vpack.c.b16 %v1191, %v1190
        %v1210 = vpack.c.b16 %v1193, %v1192
        %v1211 = vpack.c.b16 %v1195, %v1194
        %1228 = vmatprep.subr.bf16.mxu0 0
        %1229 = vmatpush1.bf16.msra.mxu0 %v1203
        %1230 = vmatprep.subr.bf16.mxu0 0
        %1231 = vmatpush1.bf16.msra.mxu0 %v1202
        %1232 = vmatprep.subr.bf16.mxu0 0
        %1233 = vmatpush1.bf16.msra.mxu0 %v1201
        %1234 = vmatprep.subr.bf16.mxu0 0
        %1235 = vmatpush1.bf16.msra.mxu0 %v1200
        %1236 = vmatprep.subr.bf16.mxu0 0
        %1237 = vmatpush1.bf16.msra.mxu0 %v1199
        %1238 = vmatprep.subr.bf16.mxu0 0
        %1239 = vmatpush1.bf16.msra.mxu0 %v1198
        %1240 = vmatprep.subr.bf16.mxu0 0
        %1241 = vmatpush1.bf16.msra.mxu0 %v1197
        %1242 = vmatprep.subr.bf16.mxu0 0
        %1243 = vmatpush1.bf16.msra.mxu0 %v1196
        %1244 = vmatprep.subr.bf16.mxu0 0
        %1245 = vmatpush2.bf16.msra.mxu0 %v1211
        %1246 = vmatprep.subr.bf16.mxu0 0
        %1247 = vmatpush2.bf16.msra.mxu0 %v1210
        %1248 = vmatprep.subr.bf16.mxu0 0
        %1249 = vmatpush2.bf16.msra.mxu0 %v1209
        %1250 = vmatprep.subr.bf16.mxu0 0
        %1251 = vmatpush2.bf16.msra.mxu0 %v1208
        %1252 = vmatprep.subr.bf16.mxu0 0
        %1253 = vmatpush2.bf16.msra.mxu0 %v1207
        %1254 = vmatprep.subr.bf16.mxu0 0
        %1255 = vmatpush2.bf16.msra.mxu0 %v1206
        %1256 = vmatprep.subr.bf16.mxu0 0
        %1257 = vmatpush2.bf16.msra.mxu0 %v1205
        %1258 = vmatprep.subr.bf16.mxu0 0
        %1259 = vmatpush2.bf16.msra.mxu0 %v1204
        %1260 = vmatprep.mubr.bf16.mxu0 %v1123
        %1261 = vmatmul.mubr.bf16.gmra.mxu0 %v1122
        %v1262 = vpop.f32.mrf.mxu0
        %v1263 = vadd.f32 %v1130, %v1262
        %v1264 = vpop.f32.mrf.mxu0
        %v1265 = vpop.f32.mrf.mxu0
        %v1266 = vadd.f32 %v1130, %v1265
        %v1267 = vpop.f32.mrf.mxu0
        %1268 = vmatprep.mubr.bf16.mxu0 %v1125
        %1269 = vmatmul.mubr.bf16.gmra.mxu0 %v1124
        %v1270 = vpop.f32.mrf.mxu0
        %v1271 = vadd.f32 %v1130, %v1270
        %v1272 = vpop.f32.mrf.mxu0
        %v1273 = vpop.f32.mrf.mxu0
        %v1274 = vpop.f32.mrf.mxu0
        %1275 = vdwg.mxu0
        %v1276 = vmax.f32 %v1263, 0.0
        %v1277 = vmax.f32 %v1266, 0.0
        %v1278 = vmax.f32 %v1271, 0.0
        %v1279 = vrot.slane %v1276, 6
        %v1280 = vrot.slane %v1277, 6
        %v1281 = vrot.slane %v1278, 6
        %v1282 = vsel %vm1109, %v1280, %v1281
        %v1283 = vsel %vm1109, %v1279, %v1280
        %v1284 = vsel %vm1109, %v1281, %v1279
        %v1285 = vsel %vm1116, %v1284, 0.0
        %v1286 = vsel %vm1117, %v1283, 0.0
        %v1287 = vsel %vm1118, %v1282, 0.0
        %v1288 = vpack.c.bf16 %v1277, %v1276
        %v1289 = vpack.c.bf16 %v1286, %v1285
        %v1290 = vpack.c.bf16 %v1278, %v1278
        %v1291 = vpack.c.bf16 %v1287, %v1287
        %v1293 = vlaneseq
        %v1294 = vshrl.u32 %v1293, 7
        %v1295 = vsub.s32 0, %v1294
        %v1296 = vrot.slane %v1102, %v1295
        %v1330 = vunpack.c.l.b16 %v1070
        %v1331 = vunpack.c.l.b16 %v1071
        %v1332 = vunpack.c.l.b16 %v1072
        %v1333 = vunpack.c.l.b16 %v1073
        %v1334 = vunpack.c.l.b16 %v1074
        %v1335 = vunpack.c.l.b16 %v1075
        %v1336 = vunpack.c.l.b16 %v1076
        %v1337 = vunpack.c.l.b16 %v1077
        %v1338 = vunpack.c.l.b16 %v1078
        %v1339 = vunpack.c.l.b16 %v1079
        %v1340 = vunpack.c.l.b16 %v1080
        %v1341 = vunpack.c.l.b16 %v1081
        %v1342 = vunpack.c.l.b16 %v1082
        %v1343 = vunpack.c.l.b16 %v1083
        %v1344 = vunpack.c.l.b16 %v1084
        %v1345 = vunpack.c.l.b16 %v1085
        %v1346 = vunpack.c.l.b16 %v1086
        %v1347 = vunpack.c.l.b16 %v1087
        %v1348 = vunpack.c.l.b16 %v1088
        %v1349 = vunpack.c.l.b16 %v1089
        %v1350 = vunpack.c.l.b16 %v1090
        %v1351 = vunpack.c.l.b16 %v1091
        %v1352 = vunpack.c.l.b16 %v1092
        %v1353 = vunpack.c.l.b16 %v1093
        %v1354 = vunpack.c.l.b16 %v1094
        %v1355 = vunpack.c.l.b16 %v1095
        %v1356 = vunpack.c.l.b16 %v1096
        %v1357 = vunpack.c.l.b16 %v1097
        %v1358 = vunpack.c.l.b16 %v1098
        %v1359 = vunpack.c.l.b16 %v1099
        %v1360 = vunpack.c.l.b16 %v1100
        %v1361 = vunpack.c.l.b16 %v1101
        %v1362 = vpack.c.b16 %v1331, %v1330
        %v1363 = vpack.c.b16 %v1333, %v1332
        %v1364 = vpack.c.b16 %v1335, %v1334
        %v1365 = vpack.c.b16 %v1337, %v1336
        %v1366 = vpack.c.b16 %v1339, %v1338
        %v1367 = vpack.c.b16 %v1341, %v1340
        %v1368 = vpack.c.b16 %v1343, %v1342
        %v1369 = vpack.c.b16 %v1345, %v1344
        %v1370 = vpack.c.b16 %v1347, %v1346
        %v1371 = vpack.c.b16 %v1349, %v1348
        %v1372 = vpack.c.b16 %v1351, %v1350
        %v1373 = vpack.c.b16 %v1353, %v1352
        %v1374 = vpack.c.b16 %v1355, %v1354
        %v1375 = vpack.c.b16 %v1357, %v1356
        %v1376 = vpack.c.b16 %v1359, %v1358
        %v1377 = vpack.c.b16 %v1361, %v1360
        %1394 = vmatprep.subr.bf16.mxu0 0
        %1395 = vmatpush1.bf16.msra.mxu0 %v1369
        %1396 = vmatprep.subr.bf16.mxu0 0
        %1397 = vmatpush1.bf16.msra.mxu0 %v1368
        %1398 = vmatprep.subr.bf16.mxu0 0
        %1399 = vmatpush1.bf16.msra.mxu0 %v1367
        %1400 = vmatprep.subr.bf16.mxu0 0
        %1401 = vmatpush1.bf16.msra.mxu0 %v1366
        %1402 = vmatprep.subr.bf16.mxu0 0
        %1403 = vmatpush1.bf16.msra.mxu0 %v1365
        %1404 = vmatprep.subr.bf16.mxu0 0
        %1405 = vmatpush1.bf16.msra.mxu0 %v1364
        %1406 = vmatprep.subr.bf16.mxu0 0
        %1407 = vmatpush1.bf16.msra.mxu0 %v1363
        %1408 = vmatprep.subr.bf16.mxu0 0
        %1409 = vmatpush1.bf16.msra.mxu0 %v1362
        %1410 = vmatprep.subr.bf16.mxu0 0
        %1411 = vmatpush2.bf16.msra.mxu0 %v1377
        %1412 = vmatprep.subr.bf16.mxu0 0
        %1413 = vmatpush2.bf16.msra.mxu0 %v1376
        %1414 = vmatprep.subr.bf16.mxu0 0
        %1415 = vmatpush2.bf16.msra.mxu0 %v1375
        %1416 = vmatprep.subr.bf16.mxu0 0
        %1417 = vmatpush2.bf16.msra.mxu0 %v1374
        %1418 = vmatprep.subr.bf16.mxu0 0
        %1419 = vmatpush2.bf16.msra.mxu0 %v1373
        %1420 = vmatprep.subr.bf16.mxu0 0
        %1421 = vmatpush2.bf16.msra.mxu0 %v1372
        %1422 = vmatprep.subr.bf16.mxu0 0
        %1423 = vmatpush2.bf16.msra.mxu0 %v1371
        %1424 = vmatprep.subr.bf16.mxu0 0
        %1425 = vmatpush2.bf16.msra.mxu0 %v1370
        %1426 = vmatprep.mubr.bf16.mxu0 %v1289
        %1427 = vmatmul.mubr.bf16.gmra.mxu0 %v1288
        %v1428 = vpop.f32.mrf.mxu0
        %v1429 = vpop.f32.mrf.mxu0
        %v1430 = vpop.f32.mrf.mxu0
        %v1431 = vadd.f32 %v1296, %v1430
        %v1432 = vpop.f32.mrf.mxu0
        %1433 = vmatprep.mubr.bf16.mxu0 %v1291
        %1434 = vmatmul.mubr.bf16.gmra.mxu0 %v1290
        %v1435 = vpop.f32.mrf.mxu0
        %v1436 = vadd.f32 %v1296, %v1435
        %v1437 = vpop.f32.mrf.mxu0
        %v1438 = vpop.f32.mrf.mxu0
        %v1439 = vpop.f32.mrf.mxu0
        %1440 = vdwg.mxu0
        %v1441 = vmax.f32 %v1431, 0.0
        %v1442 = vmax.f32 %v1436, 0.0
        %v1443 = vadd.f32 %v1441, %v1035
        %v1444 = vadd.f32 %v1442, %v1036
        %v1445 = vmax.f32 %v1443, 0.0
        %v1446 = vmax.f32 %v1444, 0.0
        %v1447 = vld [vmem:[#allocation7] sm:$0xf]
        %v1448 = vld [vmem:[#allocation7 + $0x4] sm:$0xf]
        %v1449 = vld [vmem:[#allocation7 + $0x8] sm:$0xf]
        %v1450 = vld [vmem:[#allocation7 + $0xc] sm:$0xf]
        %v1451 = vld [vmem:[#allocation7 + $0x10] sm:$0xf]
        %v1452 = vld [vmem:[#allocation7 + $0x14] sm:$0xf]
        %v1453 = vld [vmem:[#allocation7 + $0x18] sm:$0xf]
        %v1454 = vld [vmem:[#allocation7 + $0x1c] sm:$0xf]
        %v1455 = vld [vmem:[#allocation7 + $0x20] sm:$0xf]
        %v1456 = vld [vmem:[#allocation7 + $0x24] sm:$0xf]
        %v1457 = vld [vmem:[#allocation7 + $0x28] sm:$0xf]
        %v1458 = vld [vmem:[#allocation7 + $0x2c] sm:$0xf]
        %v1459 = vld [vmem:[#allocation7 + $0x30] sm:$0xf]
        %v1460 = vld [vmem:[#allocation7 + $0x34] sm:$0xf]
        %v1461 = vld [vmem:[#allocation7 + $0x38] sm:$0xf]
        %v1462 = vld [vmem:[#allocation7 + $0x3c] sm:$0xf]
        %v1463 = vld [vmem:[%s14] sm:$0x1]
        %v1464 = vpack.c.bf16 %v1446, %v1445
        %v1466 = vlaneseq
        %v1467 = vshrl.u32 %v1466, 7
        %v1468 = vsub.s32 0, %v1467
        %v1469 = vrot.slane %v1463, %v1468
        %v1487 = vunpack.c.l.b16 %v1447
        %v1488 = vunpack.c.l.b16 %v1448
        %v1489 = vunpack.c.l.b16 %v1449
        %v1490 = vunpack.c.l.b16 %v1450
        %v1491 = vunpack.c.l.b16 %v1451
        %v1492 = vunpack.c.l.b16 %v1452
        %v1493 = vunpack.c.l.b16 %v1453
        %v1494 = vunpack.c.l.b16 %v1454
        %v1495 = vunpack.c.l.b16 %v1455
        %v1496 = vunpack.c.l.b16 %v1456
        %v1497 = vunpack.c.l.b16 %v1457
        %v1498 = vunpack.c.l.b16 %v1458
        %v1499 = vunpack.c.l.b16 %v1459
        %v1500 = vunpack.c.l.b16 %v1460
        %v1501 = vunpack.c.l.b16 %v1461
        %v1502 = vunpack.c.l.b16 %v1462
        %v1503 = vpack.c.b16 %v1488, %v1487
        %v1504 = vpack.c.b16 %v1490, %v1489
        %v1505 = vpack.c.b16 %v1492, %v1491
        %v1506 = vpack.c.b16 %v1494, %v1493
        %v1507 = vpack.c.b16 %v1496, %v1495
        %v1508 = vpack.c.b16 %v1498, %v1497
        %v1509 = vpack.c.b16 %v1500, %v1499
        %v1510 = vpack.c.b16 %v1502, %v1501
        %1519 = vmatprep.subr.bf16.mxu0 0
        %1520 = vmatpush1.bf16.msra.mxu0 %v1510
        %1521 = vmatprep.subr.bf16.mxu0 0
        %1522 = vmatpush1.bf16.msra.mxu0 %v1509
        %1523 = vmatprep.subr.bf16.mxu0 0
        %1524 = vmatpush1.bf16.msra.mxu0 %v1508
        %1525 = vmatprep.subr.bf16.mxu0 0
        %1526 = vmatpush1.bf16.msra.mxu0 %v1507
        %1527 = vmatprep.subr.bf16.mxu0 0
        %1528 = vmatpush1.bf16.msra.mxu0 %v1506
        %1529 = vmatprep.subr.bf16.mxu0 0
        %1530 = vmatpush1.bf16.msra.mxu0 %v1505
        %1531 = vmatprep.subr.bf16.mxu0 0
        %1532 = vmatpush1.bf16.msra.mxu0 %v1504
        %1533 = vmatprep.subr.bf16.mxu0 0
        %1534 = vmatpush1.bf16.msra.mxu0 %v1503
        %1535 = vmatprep.subr.bf16.mxu0 0
        %1536 = vmatpush2.bf16.msra.mxu0 0
        %1537 = vmatprep.subr.bf16.mxu0 0
        %1538 = vmatpush2.bf16.msra.mxu0 0
        %1539 = vmatprep.subr.bf16.mxu0 0
        %1540 = vmatpush2.bf16.msra.mxu0 0
        %1541 = vmatprep.subr.bf16.mxu0 0
        %1542 = vmatpush2.bf16.msra.mxu0 0
        %1543 = vmatprep.subr.bf16.mxu0 0
        %1544 = vmatpush2.bf16.msra.mxu0 0
        %1545 = vmatprep.subr.bf16.mxu0 0
        %1546 = vmatpush2.bf16.msra.mxu0 0
        %1547 = vmatprep.subr.bf16.mxu0 0
        %1548 = vmatpush2.bf16.msra.mxu0 0
        %1549 = vmatprep.subr.bf16.mxu0 0
        %1550 = vmatpush2.bf16.msra.mxu0 0
        %1551 = vmatprep.mubr.bf16.mxu0 0
        %1552 = vmatmul.mubr.bf16.gmra.mxu0 %v1464
        %v1553 = vpop.f32.mrf.mxu0
        %v1554 = vadd.f32 %v1469, %v1553
        %v1555 = vpop.f32.mrf.mxu0
        %v1556 = vpop.f32.mrf.mxu0
        %v1557 = vadd.f32 %v1469, %v1556
        %v1558 = vpop.f32.mrf.mxu0
        %1559 = vdwg.mxu0
        %1560 = vst [vmem:[%s587] sm:$0xff] %v1554
        %1561 = vst [vmem:[%s587 + $0x8] sm:$0xff] %v1557
        %s1562 = sand.u32 %s384, 1
        %s1563 = scalar_lea.sflag [#allocation4], %s1562
        %s1564 = sand.u32 %s384, 1
        %s1565 = smul.addr %s1564, 16
        %s1566 = scalar_lea.vmem [#allocation8], %s1565
        // Predicated region
        $region93: #{tpu_custom_call.1} parent=79 // pred_check
          %p1567 = pneg %p394
        $region94: #{tpu_custom_call.1} parent=79 // pred_check_branch
          %1569 = sbr.rel (%p1567) target = $region96
        $region95: #{tpu_custom_call.1} parent=79 // pred_region
          %s1570 = smul.u32 2, %s36
          %s1572 = ssub.s32 256, 256
          %1573 = vsyncadd %s1563, %s1572
          %s1574 = smul.addr %s35, 2
          %s1575 = sadd.s32 %s1570, %s1574
          %s1576 = smul.addr %s1575, 128
          %s1577 = scalar_lea.hbm %s15, %s1576
          %s1578 = sshll.u32 %s1566, 4
          %s1579 = int_to_ptr.vmem [resolvable:$true] %s1578
          %1584 = dma.vmem_to_hbm [thread:$0]  %s1579, 256, %s1577, %s1563, 128, 128, 8
        $region96: #{tpu_custom_call.1} parent=79 // pred_fallthru
          _
      $region80: #{tpu_custom_call.1} parent=5 // pred_fallthru
        _
      %p1585 = scmp.le.s32.totalorder 2, %s26
      // Predicated region
      $region97: #{tpu_custom_call.1} parent=5 // pred_check
        %p1586 = pneg %p1585
      $region98: #{tpu_custom_call.1} parent=5 // pred_check_branch
        %1588 = sbr.rel (%p1586) target = $region100
      $region99: #{tpu_custom_call.1} parent=5 // pred_region
        %s1589 = ssub.s32 %s26, 2
        // Predicated region
        $region101: #{tpu_custom_call.1} parent=99 // pred_check
          %p1590 = pneg %p400
        $region102: #{tpu_custom_call.1} parent=99 // pred_check_branch
          %1592 = sbr.rel (%p1590) target = $region104
        $region103: #{tpu_custom_call.1} parent=99 // pred_region
          %s1593 = sand.u32 %s385, 1
          %s1594 = scalar_lea.sflag [#allocation4], %s1593
          %s1595 = sand.u32 %s385, 1
          %s1596 = smul.addr %s1595, 16
          %s1597 = scalar_lea.vmem [#allocation8], %s1596
          %1598 = dma.done %s1594, 256
        $region104: #{tpu_custom_call.1} parent=99 // pred_fallthru
          _
      $region100: #{tpu_custom_call.1} parent=5 // pred_fallthru
        _
    $region6: #{tpu_custom_call.1} parent=1 // loop_footer
      %s30 = sadd.s32 1, %s26
    $region7: #{tpu_custom_call.1} parent=1 // loop_footer_branch
      %25 = sbr.rel target = $region3
    $region8: #{tpu_custom_call.1} parent=1 // loop_exit
      _
    %1599 = vsyncpa [#allocation3], 1
    %s1600 = scalar_lea.sflag [#allocation3], 1
    %1601 = vsyncpa %s1600, 1
    %1602 = vsyncpa [#allocation6], 1
    %1603 = vsyncpa [#allocation4], 1
    %s1604 = scalar_lea.sflag [#allocation4], 1
    %1605 = vsyncpa %s1604, 1

</llo_original>
